<compile_context>
chip_gen: v6e
topology: v6e:2x2x1
jax: 0.10.0
libtpu: 0.0.40
codegen_flags: <defaults>
</compile_context>

<pallas_src>
import numpy as np
import jax
import jax.numpy as jnp
from jax import lax
from jax.experimental import pallas as pl
from jax.experimental.pallas import tpu as pltpu

ALPHA = 0.7
BETA = 0.3
N_FFT = 512
HOP = N_FFT // 4          # 128
N_FREQ = N_FFT // 2 + 1   # 257 onesided bins
RE_W = 384                # cos block width (257 valid cols, padded to 3*128)
IM_W = 256                # -sin block width (bins 0..255)
NCOL = RE_W + IM_W        # 640 fused DFT matrix columns
MAGA_W = 256              # bins 0..255 (sqrt path)
MAGB_W = 128              # bin 256 lives in col 0 of this slab, rest exact zeros
OUT_W = MAGA_W + MAGB_W   # 384 accumulator width


def _round_up(x, m):
    return ((x + m - 1) // m) * m


def _cdiv(a, b):
    return -(-a // b)


def _num_parallel_splits():
    """2 on dual-TensorCore chips (v7x-class), else 1 (v5e/v6e)."""
    try:
        kind = jax.devices()[0].device_kind.lower()
    except Exception:
        return 1
    return 2 if ("v7" in kind or "tpu7" in kind) else 1


def _vmem_limit_bytes():
    cap = 128 * 1024 * 1024
    try:
        cap = int(pltpu.get_tpu_info().vmem_capacity_bytes)
    except Exception:
        pass
    return int(min(48 * 1024 * 1024, (cap * 3) // 4))


# ------------------------------------------------------------------
# Fused DFT matrix (bf16):  [cos f=0..256 | zero pad to 384 | -sin f=0..255]
# Bin 256's sin is identically zero, so it is folded into the |re| slab.
# ------------------------------------------------------------------
def _dft_matrix_fused():
    n = np.arange(N_FFT, dtype=np.float64)[:, None]
    f = np.arange(N_FREQ, dtype=np.float64)[None, :]
    ang = 2.0 * np.pi * n * f / N_FFT
    cs = np.zeros((N_FFT, NCOL), np.float32)
    cs[:, :N_FREQ] = np.cos(ang)
    cs[:, RE_W:RE_W + IM_W] = -np.sin(ang[:, :IM_W])
    return jnp.asarray(cs, dtype=jnp.bfloat16)


# ------------------------------------------------------------------
# Kernel 1: sum(|pred - target|) over the time-domain signal, natural (B, T)
# layout, resident lane-dense accumulator per parallel split, reduce deferred
# to the wrapper.
# ------------------------------------------------------------------
def _time_l1_sum(p_bt, t_bt, splits, vmem_limit):
    B, T = p_bt.shape
    Tp = T
    if T > 128 and T % 128 != 0:
        # one small zero-pad keeps lane tiles 128-aligned; |0-0| contributes 0
        padn = _round_up(T, 128) - T
        p_bt = jnp.pad(p_bt, ((0, 0), (0, padn)))
        t_bt = jnp.pad(t_bt, ((0, 0), (0, padn)))
        Tp = T + padn

    if Tp <= 128:
        tl = Tp
    else:
        lane_target = max(512, ((1 << 19) // (4 * B)) // 128 * 128)
        tl = min(Tp, lane_target)

    n_tblocks = _cdiv(Tp, tl)
    splits = splits if n_tblocks > 1 else 1
    spp = _cdiv(n_tblocks, splits)
    need_mask = splits * spp * tl > Tp

    def kernel(p_ref, t_ref, out_ref):
        @pl.when(pl.program_id(1) == 0)
        def _():
            out_ref[...] = jnp.zeros_like(out_ref)

        d = jnp.abs(p_ref[...] - t_ref[...])
        if need_mask:  # ragged tail / duplicated blocks -> zero contribution
            col0 = (pl.program_id(0) * spp + pl.program_id(1)) * tl
            lane = lax.broadcasted_iota(jnp.int32, (1, tl), 1)
            d = jnp.where(lane < (Tp - col0), d, 0.0)
        out_ref[...] += d[None]

    def in_map(s, j):
        # clamp so duplicated (masked) blocks never DMA out of bounds
        return (0, jnp.minimum(s * spp + j, n_tblocks - 1))

    out = pl.pallas_call(
        kernel,
        out_shape=jax.ShapeDtypeStruct((splits, B, tl), jnp.float32),
        grid_spec=pltpu.PrefetchScalarGridSpec(
            num_scalar_prefetch=0,
            grid=(splits, spp),
            in_specs=[pl.BlockSpec((B, tl), in_map),
                      pl.BlockSpec((B, tl), in_map)],
            out_specs=pl.BlockSpec((1, B, tl), lambda s, j: (s, 0, 0)),
        ),
        compiler_params=pltpu.CompilerParams(
            dimension_semantics=("parallel", "arbitrary"),
            vmem_limit_bytes=vmem_limit),
        cost_estimate=pl.CostEstimate(
            flops=3 * B * Tp,
            transcendentals=0,
            bytes_accessed=2 * B * Tp * 4 + splits * B * tl * 4),
    )(p_bt, t_bt)
    return jnp.sum(out)


# ------------------------------------------------------------------
# Kernel 2: sum(| |STFT(pred)| - |STFT(target)| |), in-kernel framing via the
# hop-split trick (4 partial MXU matmuls on 128-row shifted window slices).
# ------------------------------------------------------------------
def _stft_l1_sum(p_bt, t_bt, cs_mat, splits, vmem_limit):
    B, T = p_bt.shape
    pad = N_FFT // 2
    n_frames = 1 + T // HOP                      # torch.stft center=True frame count

    tm = min(512, _round_up(n_frames, 8))        # frames per grid step
    steps = _cdiv(n_frames, tm)                  # steps per batch element
    R_pad = steps * tm + 8                       # padded 128-sample rows per batch

    def to_rows(x):
        xp = jnp.pad(x, ((0, 0), (pad, pad)), mode="reflect")   # (B, T + 512)
        xp = jnp.pad(xp, ((0, 0), (0, R_pad * HOP - xp.shape[1])))
        return xp.reshape(B, R_pad, HOP)

    p_rows = to_rows(p_bt).reshape(B * R_pad, HOP)               # f32 rows
    t_rows = to_rows(t_bt).reshape(B * R_pad, HOP)

    nblk = B * steps
    spp = _cdiv(nblk, splits)
    nblk_pad = splits * spp

    # Overlapping (tm + 8, 128) row windows: only ~(1 + 8/tm) x the signal,
    # instead of the 4x overlapping-frame expansion.
    g = np.arange(nblk_pad)
    b_idx = np.minimum(g // steps, B - 1)
    j_idx = g % steps
    base = (b_idx * R_pad + j_idx * tm)[:, None] + np.arange(tm + 8)[None, :]
    base = np.where(g[:, None] < nblk, base, 0).astype(np.int32)
    gidx = jnp.asarray(base)                                     # (nblk_pad, tm+8)

    p_win = jnp.take(p_rows, gidx, axis=0)                       # (nblk_pad, tm+8, 128)
    t_win = jnp.take(t_rows, gidx, axis=0)

    def kernel(p_ref, t_ref, cs_ref, out_ref):
        s = pl.program_id(0)
        j = pl.program_id(1)

        @pl.when(j == 0)
        def _():
            out_ref[...] = jnp.zeros_like(out_ref)

        gblk = s * spp + j
        jj = gblk % steps
        valid = jnp.where(gblk < nblk, n_frames - jj * tm, 0)    # frames valid in tile

        # Hop-split DFT: frame i = rows[i..i+3]; accumulate 4 partial matmuls.
        acc_p = jnp.zeros((tm, NCOL), jnp.float32)
        acc_t = jnp.zeros((tm, NCOL), jnp.float32)
        for k in range(4):
            rhs = cs_ref[pl.ds(k * HOP, HOP), :]                 # (128, 640) bf16
            lp = p_ref[0, pl.ds(k, tm), :].astype(jnp.bfloat16)  # (tm, 128)
            lt = t_ref[0, pl.ds(k, tm), :].astype(jnp.bfloat16)
            acc_p = acc_p + jnp.dot(lp, rhs, preferred_element_type=jnp.float32)
            acc_t = acc_t + jnp.dot(lt, rhs, preferred_element_type=jnp.float32)

        def mags(acc):
            re = acc[:, :RE_W]
            im = acc[:, RE_W:]
            mag_a = jnp.sqrt(re[:, :MAGA_W] * re[:, :MAGA_W] + im * im)  # bins 0..255
            mag_b = jnp.abs(re[:, MAGA_W:RE_W])                          # bin 256 (+ exact zeros)
            return mag_a, mag_b

        pa, pb = mags(acc_p)
        ta, tb = mags(acc_t)
        mask = lax.broadcasted_iota(jnp.int32, (tm, 1), 0) < valid
        da = jnp.where(mask, jnp.abs(pa - ta), 0.0)
        db = jnp.where(mask, jnp.abs(pb - tb), 0.0)
        out_ref[...] += jnp.concatenate([da, db], axis=1)[None]

    out = pl.pallas_call(
        kernel,
        out_shape=jax.ShapeDtypeStruct((splits, tm, OUT_W), jnp.float32),
        grid_spec=pltpu.PrefetchScalarGridSpec(
            num_scalar_prefetch=0,
            grid=(splits, spp),
            in_specs=[
                pl.BlockSpec((1, tm + 8, HOP), lambda s, j: (s * spp + j, 0, 0)),
                pl.BlockSpec((1, tm + 8, HOP), lambda s, j: (s * spp + j, 0, 0)),
                pl.BlockSpec((N_FFT, NCOL), lambda s, j: (0, 0)),
            ],
            out_specs=pl.BlockSpec((1, tm, OUT_W), lambda s, j: (s, 0, 0)),
        ),
        compiler_params=pltpu.CompilerParams(
            dimension_semantics=("parallel", "arbitrary"),
            vmem_limit_bytes=vmem_limit),
        cost_estimate=pl.CostEstimate(
            flops=2 * 2 * nblk_pad * tm * N_FFT * NCOL,
            transcendentals=2 * nblk_pad * tm * MAGA_W,
            bytes_accessed=(2 * nblk_pad * (tm + 8) * HOP * 4
                            + N_FFT * NCOL * 2
                            + splits * tm * OUT_W * 4),
        ),
    )(p_win, t_win, cs_mat)
    return jnp.sum(out), B * N_FREQ * n_frames


# ------------------------------------------------------------------
# Forward pass (matches AECLoss.forward):
#   alpha * mean(|pred - target|) + beta * mean(| |STFT(pred)| - |STFT(target)| |)
# ------------------------------------------------------------------
def aec_loss(pred, target, alpha=ALPHA, beta=BETA):
    B, T = pred.shape[0], pred.shape[1]
    if T <= N_FFT // 2:
        raise ValueError("T must exceed n_fft//2 (=256) for torch-style reflect padding")
    p = pred.reshape(B, T).astype(jnp.float32)
    t = target.reshape(B, T).astype(jnp.float32)

    splits = _num_parallel_splits()
    vmem_limit = _vmem_limit_bytes()
    cs_mat = _dft_matrix_fused()

    time_loss = _time_l1_sum(p, t, splits, vmem_limit) / jnp.float32(B * T)
    freq_sum, n_el = _stft_l1_sum(p, t, cs_mat, splits, vmem_limit)
    freq_loss = freq_sum / jnp.float32(n_el)
    return alpha * time_loss + beta * freq_loss


# ------------------------------------------------------------------
# Pure-JAX reference (jnp.fft) for a correctness spot-check.
# ------------------------------------------------------------------
def _ref_aec_loss(pred, target, alpha=ALPHA, beta=BETA):
    time_loss = jnp.mean(jnp.abs(pred - target))

    def mag(x_bt):
        pad = N_FFT // 2
        xp = jnp.pad(x_bt, ((0, 0), (pad, pad)), mode="reflect")
        nfr = 1 + (xp.shape[1] - N_FFT) // HOP
        idx = jnp.arange(nfr)[:, None] * HOP + jnp.arange(N_FFT)[None, :]
        return jnp.abs(jnp.fft.rfft(xp[:, idx], axis=-1))

    B, T = pred.shape[0], pred.shape[1]
    freq_loss = jnp.mean(jnp.abs(mag(pred.reshape(B, T)) - mag(target.reshape(B, T))))
    return alpha * time_loss + beta * freq_loss


if __name__ == "__main__":
    key = jax.random.PRNGKey(0)
    k1, k2 = jax.random.split(key)
    B, T = 2, 1024  # T must exceed n_fft//2 = 256 for reflect padding (like torch)
    pred = jax.random.normal(k1, (B, T, 1), dtype=jnp.float32)
    target = jax.random.normal(k2, (B, T, 1), dtype=jnp.float32)

    loss = jax.jit(aec_loss)(pred, target)
    jax.block_until_ready(loss)

    ref = _ref_aec_loss(pred, target)
    assert loss.shape == () and bool(jnp.isfinite(loss))
    assert jnp.allclose(loss, ref, rtol=1e-2, atol=1e-3), (loss, ref)
    print("KERNEL_OK")
</pallas_src>

<mosaic_0001>
module attributes {stable_mosaic.version = 11 : i64} {
  func.func @kernel(%arg0: i32, %arg1: i32, %arg2: memref<2x1024xf32, #tpu.memory_space<vmem>>, %arg3: memref<2x1024xf32, #tpu.memory_space<vmem>>, %arg4: memref<1x2x1024xf32, #tpu.memory_space<vmem>>) attributes {dimension_semantics = [#tpu.dimension_semantics<parallel>, #tpu.dimension_semantics<arbitrary>], iteration_bounds = array<i64: 1, 1>, scalar_prefetch = 0 : i64, scratch_operands = 0 : i64, tpu.core_type = #tpu.core_type<tc>, window_params = [{transform_indices = @transform_0, window_bounds = array<i64: 2, 1024>}, {transform_indices = @transform_1, window_bounds = array<i64: 2, 1024>}, {transform_indices = @transform_2, window_bounds = array<i64: 1, 2, 1024>}]} {
    %c0_i32 = arith.constant 0 : i32
    %0 = arith.cmpi eq, %arg1, %c0_i32 : i32
    %1 = arith.extui %0 : i1 to i32
    %c0_i32_0 = arith.constant 0 : i32
    %2 = arith.cmpi ne, %1, %c0_i32_0 : i32
    scf.if %2 {
      %cst = arith.constant 0.000000e+00 : f32
      %11 = vector.broadcast %cst : f32 to vector<1x2x1024xf32>
      %c0_10 = arith.constant 0 : index
      %c0_11 = arith.constant 0 : index
      %c0_12 = arith.constant 0 : index
      %12 = vector.load %arg4[%c0_10, %c0_11, %c0_12] : memref<1x2x1024xf32, #tpu.memory_space<vmem>>, vector<1x2x1024xf32>
      tpu.vector_store %arg4[%c0_10, %c0_11, %c0_12], %11 {strides = array<i32>} : memref<1x2x1024xf32, #tpu.memory_space<vmem>>, vector<1x2x1024xf32>,
    } else {
    }
    %c0 = arith.constant 0 : index
    %c0_1 = arith.constant 0 : index
    %3 = vector.load %arg2[%c0, %c0_1] : memref<2x1024xf32, #tpu.memory_space<vmem>>, vector<2x1024xf32>
    %c0_2 = arith.constant 0 : index
    %c0_3 = arith.constant 0 : index
    %4 = vector.load %arg3[%c0_2, %c0_3] : memref<2x1024xf32, #tpu.memory_space<vmem>>, vector<2x1024xf32>
    %5 = arith.subf %3, %4 : vector<2x1024xf32>
    %6 = math.absf %5 : vector<2x1024xf32>
    %c0_4 = arith.constant 0 : index
    %c0_5 = arith.constant 0 : index
    %c0_6 = arith.constant 0 : index
    %7 = vector.load %arg4[%c0_4, %c0_5, %c0_6] : memref<1x2x1024xf32, #tpu.memory_space<vmem>>, vector<1x2x1024xf32>
    %8 = vector.shape_cast %6 : vector<2x1024xf32> to vector<1x2x1024xf32>
    %9 = arith.addf %7, %8 : vector<1x2x1024xf32>
    %c0_7 = arith.constant 0 : index
    %c0_8 = arith.constant 0 : index
    %c0_9 = arith.constant 0 : index
    %10 = vector.load %arg4[%c0_7, %c0_8, %c0_9] : memref<1x2x1024xf32, #tpu.memory_space<vmem>>, vector<1x2x1024xf32>
    tpu.vector_store %arg4[%c0_7, %c0_8, %c0_9], %9 {strides = array<i32>} : memref<1x2x1024xf32, #tpu.memory_space<vmem>>, vector<1x2x1024xf32>,
    return
  }
  func.func @transform_0(%arg0: i32, %arg1: i32) -> (i32, i32) {
    %c1_i32 = arith.constant 1 : i32
    %0 = arith.muli %arg0, %c1_i32 : i32
    %1 = arith.addi %0, %arg1 : i32
    %c0_i32 = arith.constant 0 : i32
    %2 = arith.minsi %1, %c0_i32 : i32
    %c0_i32_0 = arith.constant 0 : i32
    %c0_i32_1 = arith.constant 0 : i32
    return %c0_i32_0, %2 : i32, i32
  }
  func.func @transform_1(%arg0: i32, %arg1: i32) -> (i32, i32) {
    %c1_i32 = arith.constant 1 : i32
    %0 = arith.muli %arg0, %c1_i32 : i32
    %1 = arith.addi %0, %arg1 : i32
    %c0_i32 = arith.constant 0 : i32
    %2 = arith.minsi %1, %c0_i32 : i32
    %c0_i32_0 = arith.constant 0 : i32
    %c0_i32_1 = arith.constant 0 : i32
    return %c0_i32_0, %2 : i32, i32
  }
  func.func @transform_2(%arg0: i32, %arg1: i32) -> (i32, i32, i32) {
    %c0_i32 = arith.constant 0 : i32
    %c0_i32_0 = arith.constant 0 : i32
    %c0_i32_1 = arith.constant 0 : i32
    return %arg0, %c0_i32, %c0_i32_0 : i32, i32, i32
  }
}

module attributes {stable_mosaic.version = 11 : i64} {
  func.func @kernel(%arg0: i32, %arg1: i32, %arg2: memref<1x24x128xf32, #tpu.memory_space<vmem>>, %arg3: memref<1x24x128xf32, #tpu.memory_space<vmem>>, %arg4: memref<512x640xbf16, #tpu.memory_space<vmem>>, %arg5: memref<1x16x384xf32, #tpu.memory_space<vmem>>) attributes {dimension_semantics = [#tpu.dimension_semantics<parallel>, #tpu.dimension_semantics<arbitrary>], iteration_bounds = array<i64: 1, 2>, scalar_prefetch = 0 : i64, scratch_operands = 0 : i64, tpu.core_type = #tpu.core_type<tc>, window_params = [{transform_indices = @transform_0, window_bounds = array<i64: 1, 24, 128>}, {transform_indices = @transform_1, window_bounds = array<i64: 1, 24, 128>}, {pipeline_mode = #tpu.pipeline_mode<synchronous>, transform_indices = @transform_2, window_bounds = array<i64: 512, 640>}, {transform_indices = @transform_3, window_bounds = array<i64: 1, 16, 384>}]} {
    %c0_i32 = arith.constant 0 : i32
    %0 = arith.cmpi eq, %arg1, %c0_i32 : i32
    %1 = arith.extui %0 : i1 to i32
    %c0_i32_0 = arith.constant 0 : i32
    %2 = arith.cmpi ne, %1, %c0_i32_0 : i32
    scf.if %2 {
      %cst_50 = arith.constant 0.000000e+00 : f32
      %105 = vector.broadcast %cst_50 : f32 to vector<1x16x384xf32>
      %c0_51 = arith.constant 0 : index
      %c0_52 = arith.constant 0 : index
      %c0_53 = arith.constant 0 : index
      %106 = vector.load %arg5[%c0_51, %c0_52, %c0_53] : memref<1x16x384xf32, #tpu.memory_space<vmem>>, vector<1x16x384xf32>
      tpu.vector_store %arg5[%c0_51, %c0_52, %c0_53], %105 {strides = array<i32>} : memref<1x16x384xf32, #tpu.memory_space<vmem>>, vector<1x16x384xf32>,
    } else {
    }
    %c2_i32 = arith.constant 2 : i32
    %3 = arith.muli %arg0, %c2_i32 : i32
    %4 = arith.addi %3, %arg1 : i32
    %c1_i32 = arith.constant 1 : i32
    %c0_i32_1 = arith.constant 0 : i32
    %5 = arith.cmpi eq, %c1_i32, %c0_i32_1 : i32
    %c1_i32_2 = arith.constant 1 : i32
    %6 = arith.select %5, %c1_i32_2, %c1_i32 : i32
    %7 = arith.remsi %4, %6 : i32
    %c0_i32_3 = arith.constant 0 : i32
    %8 = arith.cmpi ne, %7, %c0_i32_3 : i32
    %c0_i32_4 = arith.constant 0 : i32
    %9 = arith.cmpi slt, %7, %c0_i32_4 : i32
    %c0_i32_5 = arith.constant 0 : i32
    %10 = arith.cmpi slt, %6, %c0_i32_5 : i32
    %11 = arith.xori %9, %10 : i1
    %12 = arith.andi %11, %8 : i1
    %13 = arith.addi %7, %6 : i32
    %14 = arith.select %12, %13, %7 : i32
    %c2_i32_6 = arith.constant 2 : i32
    %15 = arith.cmpi slt, %4, %c2_i32_6 : i32
    %c16_i32 = arith.constant 16 : i32
    %16 = arith.muli %14, %c16_i32 : i32
    %c9_i32 = arith.constant 9 : i32
    %17 = arith.subi %c9_i32, %16 : i32
    %c0_i32_7 = arith.constant 0 : i32
    %18 = arith.select %15, %17, %c0_i32_7 : i32
    %cst = arith.constant 0.000000e+00 : f32
    %19 = vector.broadcast %cst : f32 to vector<16x640xf32>
    %cst_8 = arith.constant 0.000000e+00 : f32
    %20 = vector.broadcast %cst_8 : f32 to vector<16x640xf32>
    %c0 = arith.constant 0 : index
    %c0_9 = arith.constant 0 : index
    %21 = vector.load %arg4[%c0, %c0_9] : memref<512x640xbf16, #tpu.memory_space<vmem>>, vector<128x640xbf16>
    %c0_10 = arith.constant 0 : index
    %c0_11 = arith.constant 0 : index
    %c0_12 = arith.constant 0 : index
    %22 = vector.load %arg2[%c0_10, %c0_11, %c0_12] : memref<1x24x128xf32, #tpu.memory_space<vmem>>, vector<1x16x128xf32>
    %23 = vector.shape_cast %22 : vector<1x16x128xf32> to vector<16x128xf32>
    %24 = arith.truncf %23 : vector<16x128xf32> to vector<16x128xbf16>
    %c0_13 = arith.constant 0 : index
    %c0_14 = arith.constant 0 : index
    %c0_15 = arith.constant 0 : index
    %25 = vector.load %arg3[%c0_13, %c0_14, %c0_15] : memref<1x24x128xf32, #tpu.memory_space<vmem>>, vector<1x16x128xf32>
    %26 = vector.shape_cast %25 : vector<1x16x128xf32> to vector<16x128xf32>
    %27 = arith.truncf %26 : vector<16x128xf32> to vector<16x128xbf16>
    %cst_16 = arith.constant dense<0.000000e+00> : vector<16x640xf32>
    %28 = tpu.matmul %24, %21, %cst_16 {dimension_numbers = #tpu.dot_dimension_numbers<[1], [0], [0], [1], [0, 0, 1, 1], [], []>} : vector<16x128xbf16>, vector<128x640xbf16>, vector<16x640xf32> -> vector<16x640xf32>
    %29 = arith.addf %19, %28 : vector<16x640xf32>
    %cst_17 = arith.constant dense<0.000000e+00> : vector<16x640xf32>
    %30 = tpu.matmul %27, %21, %cst_17 {dimension_numbers = #tpu.dot_dimension_numbers<[1], [0], [0], [1], [0, 0, 1, 1], [], []>} : vector<16x128xbf16>, vector<128x640xbf16>, vector<16x640xf32> -> vector<16x640xf32>
    %31 = arith.addf %20, %30 : vector<16x640xf32>
    %c128 = arith.constant 128 : index
    %c0_18 = arith.constant 0 : index
    %32 = vector.load %arg4[%c128, %c0_18] : memref<512x640xbf16, #tpu.memory_space<vmem>>, vector<128x640xbf16>
    %c0_19 = arith.constant 0 : index
    %c1 = arith.constant 1 : index
    %c0_20 = arith.constant 0 : index
    %33 = vector.load %arg2[%c0_19, %c1, %c0_20] : memref<1x24x128xf32, #tpu.memory_space<vmem>>, vector<1x16x128xf32>
    %34 = vector.shape_cast %33 : vector<1x16x128xf32> to vector<16x128xf32>
    %35 = arith.truncf %34 : vector<16x128xf32> to vector<16x128xbf16>
    %c0_21 = arith.constant 0 : index
    %c1_22 = arith.constant 1 : index
    %c0_23 = arith.constant 0 : index
    %36 = vector.load %arg3[%c0_21, %c1_22, %c0_23] : memref<1x24x128xf32, #tpu.memory_space<vmem>>, vector<1x16x128xf32>
    %37 = vector.shape_cast %36 : vector<1x16x128xf32> to vector<16x128xf32>
    %38 = arith.truncf %37 : vector<16x128xf32> to vector<16x128xbf16>
    %cst_24 = arith.constant dense<0.000000e+00> : vector<16x640xf32>
    %39 = tpu.matmul %35, %32, %cst_24 {dimension_numbers = #tpu.dot_dimension_numbers<[1], [0], [0], [1], [0, 0, 1, 1], [], []>} : vector<16x128xbf16>, vector<128x640xbf16>, vector<16x640xf32> -> vector<16x640xf32>
    %40 = arith.addf %29, %39 : vector<16x640xf32>
    %cst_25 = arith.constant dense<0.000000e+00> : vector<16x640xf32>
    %41 = tpu.matmul %38, %32, %cst_25 {dimension_numbers = #tpu.dot_dimension_numbers<[1], [0], [0], [1], [0, 0, 1, 1], [], []>} : vector<16x128xbf16>, vector<128x640xbf16>, vector<16x640xf32> -> vector<16x640xf32>
    %42 = arith.addf %31, %41 : vector<16x640xf32>
    %c256 = arith.constant 256 : index
    %c0_26 = arith.constant 0 : index
    %43 = vector.load %arg4[%c256, %c0_26] : memref<512x640xbf16, #tpu.memory_space<vmem>>, vector<128x640xbf16>
    %c0_27 = arith.constant 0 : index
    %c2 = arith.constant 2 : index
    %c0_28 = arith.constant 0 : index
    %44 = vector.load %arg2[%c0_27, %c2, %c0_28] : memref<1x24x128xf32, #tpu.memory_space<vmem>>, vector<1x16x128xf32>
    %45 = vector.shape_cast %44 : vector<1x16x128xf32> to vector<16x128xf32>
    %46 = arith.truncf %45 : vector<16x128xf32> to vector<16x128xbf16>
    %c0_29 = arith.constant 0 : index
    %c2_30 = arith.constant 2 : index
    %c0_31 = arith.constant 0 : index
    %47 = vector.load %arg3[%c0_29, %c2_30, %c0_31] : memref<1x24x128xf32, #tpu.memory_space<vmem>>, vector<1x16x128xf32>
    %48 = vector.shape_cast %47 : vector<1x16x128xf32> to vector<16x128xf32>
    %49 = arith.truncf %48 : vector<16x128xf32> to vector<16x128xbf16>
    %cst_32 = arith.constant dense<0.000000e+00> : vector<16x640xf32>
    %50 = tpu.matmul %46, %43, %cst_32 {dimension_numbers = #tpu.dot_dimension_numbers<[1], [0], [0], [1], [0, 0, 1, 1], [], []>} : vector<16x128xbf16>, vector<128x640xbf16>, vector<16x640xf32> -> vector<16x640xf32>
    %51 = arith.addf %40, %50 : vector<16x640xf32>
    %cst_33 = arith.constant dense<0.000000e+00> : vector<16x640xf32>
    %52 = tpu.matmul %49, %43, %cst_33 {dimension_numbers = #tpu.dot_dimension_numbers<[1], [0], [0], [1], [0, 0, 1, 1], [], []>} : vector<16x128xbf16>, vector<128x640xbf16>, vector<16x640xf32> -> vector<16x640xf32>
    %53 = arith.addf %42, %52 : vector<16x640xf32>
    %c384 = arith.constant 384 : index
    %c0_34 = arith.constant 0 : index
    %54 = vector.load %arg4[%c384, %c0_34] : memref<512x640xbf16, #tpu.memory_space<vmem>>, vector<128x640xbf16>
    %c0_35 = arith.constant 0 : index
    %c3 = arith.constant 3 : index
    %c0_36 = arith.constant 0 : index
    %55 = vector.load %arg2[%c0_35, %c3, %c0_36] : memref<1x24x128xf32, #tpu.memory_space<vmem>>, vector<1x16x128xf32>
    %56 = vector.shape_cast %55 : vector<1x16x128xf32> to vector<16x128xf32>
    %57 = arith.truncf %56 : vector<16x128xf32> to vector<16x128xbf16>
    %c0_37 = arith.constant 0 : index
    %c3_38 = arith.constant 3 : index
    %c0_39 = arith.constant 0 : index
    %58 = vector.load %arg3[%c0_37, %c3_38, %c0_39] : memref<1x24x128xf32, #tpu.memory_space<vmem>>, vector<1x16x128xf32>
    %59 = vector.shape_cast %58 : vector<1x16x128xf32> to vector<16x128xf32>
    %60 = arith.truncf %59 : vector<16x128xf32> to vector<16x128xbf16>
    %cst_40 = arith.constant dense<0.000000e+00> : vector<16x640xf32>
    %61 = tpu.matmul %57, %54, %cst_40 {dimension_numbers = #tpu.dot_dimension_numbers<[1], [0], [0], [1], [0, 0, 1, 1], [], []>} : vector<16x128xbf16>, vector<128x640xbf16>, vector<16x640xf32> -> vector<16x640xf32>
    %62 = arith.addf %51, %61 : vector<16x640xf32>
    %cst_41 = arith.constant dense<0.000000e+00> : vector<16x640xf32>
    %63 = tpu.matmul %60, %54, %cst_41 {dimension_numbers = #tpu.dot_dimension_numbers<[1], [0], [0], [1], [0, 0, 1, 1], [], []>} : vector<16x128xbf16>, vector<128x640xbf16>, vector<16x640xf32> -> vector<16x640xf32>
    %64 = arith.addf %53, %63 : vector<16x640xf32>
    %65 = vector.extract_strided_slice %62 {offsets = [0, 0], sizes = [16, 384], strides = [1, 1]} : vector<16x640xf32> to vector<16x384xf32>
    %66 = vector.extract_strided_slice %62 {offsets = [0, 384], sizes = [16, 256], strides = [1, 1]} : vector<16x640xf32> to vector<16x256xf32>
    %67 = vector.extract_strided_slice %65 {offsets = [0, 0], sizes = [16, 256], strides = [1, 1]} : vector<16x384xf32> to vector<16x256xf32>
    %68 = vector.extract_strided_slice %65 {offsets = [0, 0], sizes = [16, 256], strides = [1, 1]} : vector<16x384xf32> to vector<16x256xf32>
    %69 = arith.mulf %67, %68 : vector<16x256xf32>
    %70 = arith.mulf %66, %66 : vector<16x256xf32>
    %71 = arith.addf %69, %70 : vector<16x256xf32>
    %72 = math.sqrt %71 : vector<16x256xf32>
    %73 = vector.extract_strided_slice %65 {offsets = [0, 256], sizes = [16, 128], strides = [1, 1]} : vector<16x384xf32> to vector<16x128xf32>
    %74 = math.absf %73 : vector<16x128xf32>
    %75 = vector.extract_strided_slice %64 {offsets = [0, 0], sizes = [16, 384], strides = [1, 1]} : vector<16x640xf32> to vector<16x384xf32>
    %76 = vector.extract_strided_slice %64 {offsets = [0, 384], sizes = [16, 256], strides = [1, 1]} : vector<16x640xf32> to vector<16x256xf32>
    %77 = vector.extract_strided_slice %75 {offsets = [0, 0], sizes = [16, 256], strides = [1, 1]} : vector<16x384xf32> to vector<16x256xf32>
    %78 = vector.extract_strided_slice %75 {offsets = [0, 0], sizes = [16, 256], strides = [1, 1]} : vector<16x384xf32> to vector<16x256xf32>
    %79 = arith.mulf %77, %78 : vector<16x256xf32>
    %80 = arith.mulf %76, %76 : vector<16x256xf32>
    %81 = arith.addf %79, %80 : vector<16x256xf32>
    %82 = math.sqrt %81 : vector<16x256xf32>
    %83 = vector.extract_strided_slice %75 {offsets = [0, 256], sizes = [16, 128], strides = [1, 1]} : vector<16x384xf32> to vector<16x128xf32>
    %84 = math.absf %83 : vector<16x128xf32>
    %85 = tpu.iota {dimensions = array<i32: 0>} : vector<16x1xi32>
    %86 = vector.broadcast %18 : i32 to vector<16x1xi32>
    %87 = arith.cmpi slt, %85, %86 : vector<16x1xi32>
    %88 = arith.subf %72, %82 : vector<16x256xf32>
    %89 = math.absf %88 : vector<16x256xf32>
    %cst_42 = arith.constant 0.000000e+00 : f32
    %90 = vector.shape_cast %87 : vector<16x1xi1> to vector<16x1xi1>
    %91 = vector.broadcast %90 : vector<16x1xi1> to vector<16x256xi1>
    %92 = vector.broadcast %cst_42 : f32 to vector<16x256xf32>
    %93 = arith.select %91, %89, %92 : vector<16x256xi1>, vector<16x256xf32>
    %94 = arith.subf %74, %84 : vector<16x128xf32>
    %95 = math.absf %94 : vector<16x128xf32>
    %cst_43 = arith.constant 0.000000e+00 : f32
    %96 = vector.shape_cast %87 : vector<16x1xi1> to vector<16x1xi1>
    %97 = vector.broadcast %96 : vector<16x1xi1> to vector<16x128xi1>
    %98 = vector.broadcast %cst_43 : f32 to vector<16x128xf32>
    %99 = arith.select %97, %95, %98 : vector<16x128xi1>, vector<16x128xf32>
    %c0_44 = arith.constant 0 : index
    %c0_45 = arith.constant 0 : index
    %c0_46 = arith.constant 0 : index
    %100 = vector.load %arg5[%c0_44, %c0_45, %c0_46] : memref<1x16x384xf32, #tpu.memory_space<vmem>>, vector<1x16x384xf32>
    %101 = tpu.concatenate %93, %99 in 1 : vector<16x256xf32>, vector<16x128xf32> -> vector<16x384xf32>
    %102 = vector.shape_cast %101 : vector<16x384xf32> to vector<1x16x384xf32>
    %103 = arith.addf %100, %102 : vector<1x16x384xf32>
    %c0_47 = arith.constant 0 : index
    %c0_48 = arith.constant 0 : index
    %c0_49 = arith.constant 0 : index
    %104 = vector.load %arg5[%c0_47, %c0_48, %c0_49] : memref<1x16x384xf32, #tpu.memory_space<vmem>>, vector<1x16x384xf32>
    tpu.vector_store %arg5[%c0_47, %c0_48, %c0_49], %103 {strides = array<i32>} : memref<1x16x384xf32, #tpu.memory_space<vmem>>, vector<1x16x384xf32>,
    return
  }
  func.func @transform_0(%arg0: i32, %arg1: i32) -> (i32, i32, i32) {
    %c2_i32 = arith.constant 2 : i32
    %0 = arith.muli %arg0, %c2_i32 : i32
    %1 = arith.addi %0, %arg1 : i32
    %c0_i32 = arith.constant 0 : i32
    %c0_i32_0 = arith.constant 0 : i32
    %c0_i32_1 = arith.constant 0 : i32
    return %1, %c0_i32, %c0_i32_0 : i32, i32, i32
  }
  func.func @transform_1(%arg0: i32, %arg1: i32) -> (i32, i32, i32) {
    %c2_i32 = arith.constant 2 : i32
    %0 = arith.muli %arg0, %c2_i32 : i32
    %1 = arith.addi %0, %arg1 : i32
    %c0_i32 = arith.constant 0 : i32
    %c0_i32_0 = arith.constant 0 : i32
    %c0_i32_1 = arith.constant 0 : i32
    return %1, %c0_i32, %c0_i32_0 : i32, i32, i32
  }
  func.func @transform_2(%arg0: i32, %arg1: i32) -> (i32, i32) {
    %c0_i32 = arith.constant 0 : i32
    %c0_i32_0 = arith.constant 0 : i32
    %c0_i32_1 = arith.constant 0 : i32
    return %c0_i32, %c0_i32_0 : i32, i32
  }
  func.func @transform_3(%arg0: i32, %arg1: i32) -> (i32, i32, i32) {
    %c0_i32 = arith.constant 0 : i32
    %c0_i32_0 = arith.constant 0 : i32
    %c0_i32_1 = arith.constant 0 : i32
    return %arg0, %c0_i32, %c0_i32_0 : i32, i32, i32
  }
}

</mosaic_0001>

<llo_original>
// kernel: aec_loss.2
$region0: #{aec_loss.2}
  #allocation0 [shape = 'u32[]', space=smem, size = 0x4, offset = 0x4, fixed_abs, tag = 'smem constant byte address 0x4 - core index']
  #allocation1 [shape = 'u32[144,128]{1,0:T(1,128)}', space=vmem, size = 0x12000, scoped, tag = 'internal scratch']
  %s0 = inlined_call_operand.vmem [shape: f32[2,1024], index: 0, kind: input, shape index: {}]
  %s1 = inlined_call_operand.vmem [shape: f32[2,1024], index: 1, kind: input, shape index: {}]
  %s2 = inlined_call_operand.vmem [shape: f32[1,2,1024], index: 2, kind: output, shape index: {}]
  %s3 = sld [smem:[#allocation0]]
  $region22: #{aec_loss.2} parent=0
    _
  %s5 = ssub.s32 1, %s3
  %s6 = scalar_select 0, %s5, %s3
  // Predicated region
  $region2: #{aec_loss.2} parent=0 // pred_check
    _
  $region3: #{aec_loss.2} parent=0 // pred_check_branch
    %8 = sbr.rel (0) target = $region5
  $region4: #{aec_loss.2} parent=0 // pred_region
    %s9 = sadd.s32 0, 0
    %p10 = scmp.lt.s32.totalorder %s9, 0
    %s11 = scalar_select %p10, %s9, 0
    %s12 = smul.u32 8, %s11
    %p13 = scmp.lt.s32.totalorder %s12, 7
    %s14 = scalar_select %p13, %s12, 7
    %s15 = smul.addr %s14, 2
    %s16 = scalar_lea.vmem %s0, %s15
    %s17 = sadd.s32 0, 0
    %p18 = scmp.lt.s32.totalorder %s17, 0
    %s19 = scalar_select %p18, %s17, 0
    %s20 = smul.u32 8, %s19
  $region5: #{aec_loss.2} parent=0 // pred_fallthru
    _
  // Predicated region
  $region6: #{aec_loss.2} parent=0 // pred_check
    _
  $region7: #{aec_loss.2} parent=0 // pred_check_branch
    %22 = sbr.rel (0) target = $region9
  $region8: #{aec_loss.2} parent=0 // pred_region
    %s23 = sadd.s32 0, 0
    %p24 = scmp.lt.s32.totalorder %s23, 0
    %s25 = scalar_select %p24, %s23, 0
    %s26 = smul.u32 8, %s25
    %p27 = scmp.lt.s32.totalorder %s26, 7
    %s28 = scalar_select %p27, %s26, 7
    %s29 = smul.addr %s28, 2
    %s30 = scalar_lea.vmem %s1, %s29
    %s31 = sadd.s32 0, 0
    %p32 = scmp.lt.s32.totalorder %s31, 0
    %s33 = scalar_select %p32, %s31, 0
    %s34 = smul.u32 8, %s33
  $region9: #{aec_loss.2} parent=0 // pred_fallthru
    _
  %s35 = sadd.s32 0, 0
  %p36 = scmp.lt.s32.totalorder %s35, 0
  %s37 = scalar_select %p36, %s35, 0
  %s38 = smul.u32 8, %s37
  %p39 = scmp.lt.s32.totalorder %s38, 7
  %s40 = scalar_select %p39, %s38, 7
  %s41 = smul.addr %s40, 2
  %s42 = scalar_lea.vmem %s0, %s41
  %s43 = sadd.s32 0, 0
  %p44 = scmp.lt.s32.totalorder %s43, 0
  %s45 = scalar_select %p44, %s43, 0
  %s46 = smul.u32 8, %s45
  %p47 = scmp.lt.s32.totalorder %s46, 7
  %s48 = scalar_select %p47, %s46, 7
  %s49 = smul.addr %s48, 2
  %s50 = scalar_lea.vmem %s1, %s49
  %s51 = sadd.s32 0, 0
  %p52 = scmp.lt.s32.totalorder %s51, 0
  %s53 = scalar_select %p52, %s51, 0
  %s54 = smul.u32 8, %s53
  %p55 = scmp.lt.s32.totalorder %s54, 7
  %s56 = scalar_select %p55, %s54, 7
  %s57 = smul.addr %s56, 2
  %s58 = scalar_lea.vmem %s0, %s57
  %s59 = sadd.s32 0, 0
  %p60 = scmp.lt.s32.totalorder %s59, 0
  %s61 = scalar_select %p60, %s59, 0
  %s62 = smul.u32 8, %s61
  %s63 = sadd.s32 0, 0
  %p64 = scmp.lt.s32.totalorder %s63, 0
  %s65 = scalar_select %p64, %s63, 0
  %s66 = smul.u32 8, %s65
  %p67 = scmp.lt.s32.totalorder %s66, 7
  %s68 = scalar_select %p67, %s66, 7
  %s69 = smul.addr %s68, 2
  %s70 = scalar_lea.vmem %s1, %s69
  %s71 = sadd.s32 0, 0
  %p72 = scmp.lt.s32.totalorder %s71, 0
  %s73 = scalar_select %p72, %s71, 0
  %s74 = smul.u32 8, %s73
  %p75 = scmp.eq.s32.totalorder 0, 0
  // Predicated region
  $region10: #{aec_loss.2} parent=0 // pred_check
    %p76 = pneg %p75
  $region11: #{aec_loss.2} parent=0 // pred_check_branch
    %78 = sbr.rel (%p76) target = $region13
  $region12: #{aec_loss.2} parent=0 // pred_region
    %79 = vst [vmem:[%s2] sm:$0xff] 0.0
    %80 = vst [vmem:[%s2 + $0x8] sm:$0xff] 0.0
  $region13: #{aec_loss.2} parent=0 // pred_fallthru
    _
  %v81 = vld [vmem:[%s58] sm:$0xff]
  %v82 = vld [vmem:[%s58 + $0x8] sm:$0xff]
  %v83 = vld [vmem:[%s70] sm:$0xff]
  %v84 = vld [vmem:[%s70 + $0x8] sm:$0xff]
  %v85 = vsub.f32 %v81, %v83
  %v86 = vsub.f32 %v82, %v84
  %v87 = vand.u32 2147483647, %v85
  %v88 = vand.u32 2147483647, %v86
  %v89 = vld [vmem:[%s2] sm:$0xff]
  %v90 = vld [vmem:[%s2 + $0x8] sm:$0xff]
  %v91 = vadd.f32 %v89, %v87
  %v92 = vadd.f32 %v90, %v88
  %93 = vst [vmem:[%s2] sm:$0xff] %v91
  %94 = vst [vmem:[%s2 + $0x8] sm:$0xff] %v92
  // Predicated region
  $region14: #{aec_loss.2} parent=0 // pred_check
    _
  $region15: #{aec_loss.2} parent=0 // pred_check_branch
    %96 = sbr.rel (0) target = $region17
  $region16: #{aec_loss.2} parent=0 // pred_region
    _
  $region17: #{aec_loss.2} parent=0 // pred_fallthru
    _
  // Predicated region
  $region18: #{aec_loss.2} parent=0 // pred_check
    _
  $region19: #{aec_loss.2} parent=0 // pred_check_branch
    %98 = sbr.rel (0) target = $region21
  $region20: #{aec_loss.2} parent=0 // pred_region
    _
  $region21: #{aec_loss.2} parent=0 // pred_fallthru
    _

// kernel: aec_loss.3
$region0: #{aec_loss.3}
  #allocation0 [shape = 'u32[]', space=smem, size = 0x4, offset = 0x4, fixed_abs, tag = 'smem constant byte address 0x4 - core index']
  #allocation1 [shape = 'u32[144,128]{1,0:T(1,128)}', space=vmem, size = 0x12000, scoped, tag = 'internal scratch']
  %s0 = inlined_call_operand.vmem [shape: f32[2,24,128], index: 0, kind: input, shape index: {}]
  %s1 = inlined_call_operand.vmem [shape: f32[2,24,128], index: 1, kind: input, shape index: {}]
  %s2 = inlined_call_operand.vmem [shape: bf16[512,640], index: 2, kind: input, shape index: {}]
  %s3 = inlined_call_operand.vmem [shape: f32[1,16,384], index: 3, kind: output, shape index: {}]
  %s4 = sld [smem:[#allocation0]]
  $region49: #{aec_loss.3} parent=0
    _
  %s6 = ssub.s32 1, %s4
  %s7 = scalar_select 0, %s6, %s4
  loop: start=0, step=1, limit=4
  $region2: #{aec_loss.3} parent=0 // loop_pre_header
    _
  $region3: #{aec_loss.3} parent=0 // loop_header
    %s9 = sphi 0, %s13
    %p10 = scmp.ge.s32.totalorder %s9, 4
    %s16 = sphi 0, %s28
    %s17 = sphi 0, %s24
    %s18 = sphi 0, %s16
    %s19 = sphi 0, %s17
    %s20 = sphi 0, %s18
    %s21 = sphi 0, %s19
    %s35 = sphi 0, %s37
    %s38 = sphi 0, %s35
    %s39 = sphi 0, %s38
    %s55 = sphi 0, %s39
    %s65 = sphi 0, %s67
    %s68 = sphi 0, %s65
    %s69 = sphi 0, %s68
    %s85 = sphi 0, %s69
    %s89 = sphi 0, %s89
    %s91 = sphi 0, %s89
    %s92 = sphi 0, %s91
    %s106 = sphi 0, %s92
    %s112 = sphi 0, %s114
    %s115 = sphi 0, %s112
    %s116 = sphi 0, %s115
    %s132 = sphi 0, %s116
  $region4: #{aec_loss.3} parent=0 // loop_header_branch
    %12 = sbr.rel (%p10) target = $region8
  $region5: #{aec_loss.3} parent=0 // loop_body
    %s14 = ssub.s32 %s9, 1
    %s15 = ssub.s32 %s9, 2
    %s22 = sadd.s32 1, %s17
    %p23 = scmp.ge.s32.totalorder %s22, 2
    %s24 = scalar_select %p23, 0, %s22
    %s25 = sadd.s32 1, %s16
    %s26 = scalar_select %p23, %s25, %s16
    %p27 = scmp.ge.s32.totalorder %s26, 1
    %s28 = scalar_select %p27, 0, %s26
    %s29 = smul.u32 %s16, 2
    %s30 = sadd.s32 %s29, %s17
    %s31 = smul.u32 %s28, 2
    %s32 = sadd.s32 %s31, %s24
    %s33 = ssub.s32 %s30, %s32
    %p34 = scmp.eq.s32.totalorder %s33, 0
    %s36 = sadd.s32 %s35, 1
    %s37 = scalar_select %p34, %s35, %s36
    %p40 = pneg %p34
    %p41 = scmp.eq.s32.totalorder %s9, 1
    %p42 = por %p40, %p41
    %p43 = scmp.ne.s32.totalorder %s35, %s38
    %p44 = scmp.eq.s32.totalorder %s9, 0
    %p45 = por %p43, %p44
    %p46 = scmp.ne.s32.totalorder %s35, %s38
    %p47 = scmp.eq.s32.totalorder %s14, 1
    %p48 = por %p46, %p47
    %p49 = scmp.ne.s32.totalorder %s38, %s39
    %p50 = scmp.eq.s32.totalorder %s14, 0
    %p51 = por %p49, %p50
    %p52 = scmp.ne.s32.totalorder %s38, %s39
    %p53 = scmp.eq.s32.totalorder %s15, 1
    %p54 = por %p52, %p53
    %p56 = scmp.ne.s32.totalorder %s39, %s55
    %p57 = scmp.eq.s32.totalorder %s15, 0
    %p58 = por %p56, %p57
    %s59 = smul.u32 %s16, 2
    %s60 = sadd.s32 %s59, %s17
    %s61 = smul.u32 %s28, 2
    %s62 = sadd.s32 %s61, %s24
    %s63 = ssub.s32 %s60, %s62
    %p64 = scmp.eq.s32.totalorder %s63, 0
    %s66 = sadd.s32 %s65, 1
    %s67 = scalar_select %p64, %s65, %s66
    %p70 = pneg %p64
    %p71 = scmp.eq.s32.totalorder %s9, 1
    %p72 = por %p70, %p71
    %p73 = scmp.ne.s32.totalorder %s65, %s68
    %p74 = scmp.eq.s32.totalorder %s9, 0
    %p75 = por %p73, %p74
    %p76 = scmp.ne.s32.totalorder %s65, %s68
    %p77 = scmp.eq.s32.totalorder %s14, 1
    %p78 = por %p76, %p77
    %p79 = scmp.ne.s32.totalorder %s68, %s69
    %p80 = scmp.eq.s32.totalorder %s14, 0
    %p81 = por %p79, %p80
    %p82 = scmp.ne.s32.totalorder %s68, %s69
    %p83 = scmp.eq.s32.totalorder %s15, 1
    %p84 = por %p82, %p83
    %p86 = scmp.ne.s32.totalorder %s69, %s85
    %p87 = scmp.eq.s32.totalorder %s15, 0
    %p88 = por %p86, %p87
    %s90 = sadd.s32 %s89, 1
    %p93 = scmp.eq.s32.totalorder %s9, 1
    %p94 = scmp.ne.s32.totalorder %s89, %s91
    %p95 = scmp.eq.s32.totalorder %s9, 0
    %p96 = por %p94, %p95
    %p97 = scmp.ne.s32.totalorder %s89, %s91
    %p98 = scmp.eq.s32.totalorder %s14, 1
    %p99 = por %p97, %p98
    %p100 = scmp.ne.s32.totalorder %s91, %s92
    %p101 = scmp.eq.s32.totalorder %s14, 0
    %p102 = por %p100, %p101
    %p103 = scmp.ne.s32.totalorder %s91, %s92
    %p104 = scmp.eq.s32.totalorder %s15, 1
    %p105 = por %p103, %p104
    %p107 = scmp.ne.s32.totalorder %s92, %s106
    %p108 = scmp.eq.s32.totalorder %s15, 0
    %p109 = por %p107, %p108
    %s110 = ssub.s32 %s16, %s28
    %p111 = scmp.eq.s32.totalorder %s110, 0
    %s113 = sadd.s32 %s112, 1
    %s114 = scalar_select %p111, %s112, %s113
    %p117 = pneg %p111
    %p118 = scmp.eq.s32.totalorder %s9, 1
    %p119 = por %p117, %p118
    %p120 = scmp.ne.s32.totalorder %s112, %s115
    %p121 = scmp.eq.s32.totalorder %s9, 0
    %p122 = por %p120, %p121
    %p123 = scmp.ne.s32.totalorder %s112, %s115
    %p124 = scmp.eq.s32.totalorder %s14, 1
    %p125 = por %p123, %p124
    %p126 = scmp.ne.s32.totalorder %s115, %s116
    %p127 = scmp.eq.s32.totalorder %s14, 0
    %p128 = por %p126, %p127
    %p129 = scmp.ne.s32.totalorder %s115, %s116
    %p130 = scmp.eq.s32.totalorder %s15, 1
    %p131 = por %p129, %p130
    %p133 = scmp.ne.s32.totalorder %s116, %s132
    %p134 = scmp.eq.s32.totalorder %s15, 0
    %p135 = por %p133, %p134
    %p136 = scmp.le.s32.totalorder 1, %s9
    %p137 = scmp.lt.s32.totalorder %s9, 3
    %p138 = pnand %p136, %p137
    %p139 = pneg %p138
    // Predicated region
    $region9: #{aec_loss.3} parent=5 // pred_check
      _
    $region10: #{aec_loss.3} parent=5 // pred_check_branch
      %141 = sbr.rel (%p138) target = $region12
    $region11: #{aec_loss.3} parent=5 // pred_region
      %s142 = ssub.s32 %s9, 1
      // Predicated region
      $region13: #{aec_loss.3} parent=11 // pred_check
        %p143 = pneg %p102
      $region14: #{aec_loss.3} parent=11 // pred_check_branch
        %145 = sbr.rel (%p143) target = $region16
      $region15: #{aec_loss.3} parent=11 // pred_region
        _
      $region16: #{aec_loss.3} parent=11 // pred_fallthru
        _
    $region12: #{aec_loss.3} parent=5 // pred_fallthru
      _
    %p146 = scmp.lt.s32.totalorder %s9, 2
    // Predicated region
    $region17: #{aec_loss.3} parent=5 // pred_check
      %p147 = pneg %p146
    $region18: #{aec_loss.3} parent=5 // pred_check_branch
      %149 = sbr.rel (%p147) target = $region20
    $region19: #{aec_loss.3} parent=5 // pred_region
      // Predicated region
      $region21: #{aec_loss.3} parent=19 // pred_check
        %p150 = pneg %p45
      $region22: #{aec_loss.3} parent=19 // pred_check_branch
        %152 = sbr.rel (%p150) target = $region24
      $region23: #{aec_loss.3} parent=19 // pred_region
        %s153 = smul.u32 %s16, 2
        %s154 = sadd.s32 %s153, %s17
        %p155 = scmp.lt.s32.totalorder %s154, 1
        %s156 = scalar_select %p155, %s154, 1
        %s157 = smul.addr %s156, 3
        %s158 = smul.addr %s157, 8
        %s159 = scalar_lea.vmem %s0, %s158
        %s160 = smul.u32 %s16, 2
        %s161 = sadd.s32 %s160, %s17
      $region24: #{aec_loss.3} parent=19 // pred_fallthru
        _
      // Predicated region
      $region25: #{aec_loss.3} parent=19 // pred_check
        %p162 = pneg %p75
      $region26: #{aec_loss.3} parent=19 // pred_check_branch
        %164 = sbr.rel (%p162) target = $region28
      $region27: #{aec_loss.3} parent=19 // pred_region
        %s165 = smul.u32 %s16, 2
        %s166 = sadd.s32 %s165, %s17
        %p167 = scmp.lt.s32.totalorder %s166, 1
        %s168 = scalar_select %p167, %s166, 1
        %s169 = smul.addr %s168, 3
        %s170 = smul.addr %s169, 8
        %s171 = scalar_lea.vmem %s1, %s170
        %s172 = smul.u32 %s16, 2
        %s173 = sadd.s32 %s172, %s17
      $region28: #{aec_loss.3} parent=19 // pred_fallthru
        _
    $region20: #{aec_loss.3} parent=5 // pred_fallthru
      _
    %p174 = scmp.le.s32.totalorder 1, %s9
    %p175 = scmp.lt.s32.totalorder %s9, 3
    %p176 = pnand %p174, %p175
    %p177 = pneg %p176
    // Predicated region
    $region29: #{aec_loss.3} parent=5 // pred_check
      _
    $region30: #{aec_loss.3} parent=5 // pred_check_branch
      %179 = sbr.rel (%p176) target = $region32
    $region31: #{aec_loss.3} parent=5 // pred_region
      %s180 = ssub.s32 %s9, 1
      %s181 = smul.u32 %s18, 2
      %s182 = sadd.s32 %s181, %s19
      %p183 = scmp.lt.s32.totalorder %s182, 1
      %s184 = scalar_select %p183, %s182, 1
      %s185 = smul.addr %s184, 3
      %s186 = smul.addr %s185, 8
      %s187 = scalar_lea.vmem %s0, %s186
      %p188 = pneg %p51
      %p189 = pneg %p48
      %s190 = smul.u32 %s18, 2
      %s191 = sadd.s32 %s190, %s19
      %p192 = scmp.lt.s32.totalorder %s191, 1
      %s193 = scalar_select %p192, %s191, 1
      %s194 = smul.addr %s193, 3
      %s195 = smul.addr %s194, 8
      %s196 = scalar_lea.vmem %s1, %s195
      %p197 = pneg %p81
      %p198 = pneg %p78
      %p199 = pneg %p102
      %p200 = pneg %p99
      %p201 = pneg %p128
      %p202 = pneg %p125
      %p203 = scmp.lt.s32.totalorder %s18, 0
      %s204 = scalar_select %p203, %s18, 0
      %s205 = smul.addr %s204, 6
      %s206 = smul.addr %s205, 8
      %s207 = scalar_lea.vmem %s3, %s206
      %s208 = smul.u32 %s18, 2
      %s209 = sadd.s32 %s208, %s19
      %p210 = scmp.lt.s32.totalorder %s209, 1
      %s211 = scalar_select %p210, %s209, 1
      %s212 = smul.addr %s211, 3
      %s213 = smul.addr %s212, 8
      %s214 = scalar_lea.vmem %s0, %s213
      %s215 = smul.u32 %s18, 2
      %s216 = sadd.s32 %s215, %s19
      %s217 = smul.u32 %s18, 2
      %s218 = sadd.s32 %s217, %s19
      %p219 = scmp.lt.s32.totalorder %s218, 1
      %s220 = scalar_select %p219, %s218, 1
      %s221 = smul.addr %s220, 3
      %s222 = smul.addr %s221, 8
      %s223 = scalar_lea.vmem %s1, %s222
      %s224 = smul.u32 %s18, 2
      %s225 = sadd.s32 %s224, %s19
      %p226 = scmp.lt.s32.totalorder %s18, 0
      %s227 = scalar_select %p226, %s18, 0
      %s228 = smul.addr %s227, 6
      %s229 = smul.addr %s228, 8
      %s230 = scalar_lea.vmem %s3, %s229
      %p232 = scmp.eq.s32.totalorder %s19, 0
      // Predicated region
      $region33: #{aec_loss.3} parent=31 // pred_check
        %p233 = pneg %p232
      $region34: #{aec_loss.3} parent=31 // pred_check_branch
        %235 = sbr.rel (%p233) target = $region36
      $region35: #{aec_loss.3} parent=31 // pred_region
        %236 = vst [vmem:[%s230] sm:$0xff] 0.0
        %237 = vst [vmem:[%s230 + $0x8] sm:$0xff] 0.0
        %238 = vst [vmem:[%s230 + $0x10] sm:$0xff] 0.0
        %239 = vst [vmem:[%s230 + $0x18] sm:$0xff] 0.0
        %240 = vst [vmem:[%s230 + $0x20] sm:$0xff] 0.0
        %241 = vst [vmem:[%s230 + $0x28] sm:$0xff] 0.0
      $region36: #{aec_loss.3} parent=31 // pred_fallthru
        _
      %s242 = smul.u32 %s18, 2
      %s243 = sadd.s32 %s242, %s19
      %p244 = scmp.lt.s32.totalorder %s243, 2
      %s245 = scalar_select %p244, 9, 0
      %v246 = vld [vmem:[%s2] sm:$0xff]
      %v247 = vld [vmem:[%s2 + $0x8] sm:$0xff]
      %v248 = vld [vmem:[%s2 + $0x10] sm:$0xf]
      %v249 = vld [vmem:[%s2 + $0x14] sm:$0xff]
      %v250 = vld [vmem:[%s2 + $0x1c] sm:$0xff]
      %v251 = vld [vmem:[%s2 + $0x24] sm:$0xf]
      %v252 = vld [vmem:[%s2 + $0x28] sm:$0xff]
      %v253 = vld [vmem:[%s2 + $0x30] sm:$0xff]
      %v254 = vld [vmem:[%s2 + $0x38] sm:$0xf]
      %v255 = vld [vmem:[%s2 + $0x3c] sm:$0xff]
      %v256 = vld [vmem:[%s2 + $0x44] sm:$0xff]
      %v257 = vld [vmem:[%s2 + $0x4c] sm:$0xf]
      %v258 = vld [vmem:[%s2 + $0x50] sm:$0xff]
      %v259 = vld [vmem:[%s2 + $0x58] sm:$0xff]
      %v260 = vld [vmem:[%s2 + $0x60] sm:$0xf]
      %v261 = vld [vmem:[%s2 + $0x64] sm:$0xff]
      %v262 = vld [vmem:[%s2 + $0x6c] sm:$0xff]
      %v263 = vld [vmem:[%s2 + $0x74] sm:$0xf]
      %v264 = vld [vmem:[%s2 + $0x78] sm:$0xff]
      %v265 = vld [vmem:[%s2 + $0x80] sm:$0xff]
      %v266 = vld [vmem:[%s2 + $0x88] sm:$0xf]
      %v267 = vld [vmem:[%s2 + $0x8c] sm:$0xff]
      %v268 = vld [vmem:[%s2 + $0x94] sm:$0xff]
      %v269 = vld [vmem:[%s2 + $0x9c] sm:$0xf]
      %v270 = vld [vmem:[%s2 + $0xa0] sm:$0xff]
      %v271 = vld [vmem:[%s2 + $0xa8] sm:$0xff]
      %v272 = vld [vmem:[%s2 + $0xb0] sm:$0xf]
      %v273 = vld [vmem:[%s2 + $0xb4] sm:$0xff]
      %v274 = vld [vmem:[%s2 + $0xbc] sm:$0xff]
      %v275 = vld [vmem:[%s2 + $0xc4] sm:$0xf]
      %v276 = vld [vmem:[%s2 + $0xc8] sm:$0xff]
      %v277 = vld [vmem:[%s2 + $0xd0] sm:$0xff]
      %v278 = vld [vmem:[%s2 + $0xd8] sm:$0xf]
      %v279 = vld [vmem:[%s2 + $0xdc] sm:$0xff]
      %v280 = vld [vmem:[%s2 + $0xe4] sm:$0xff]
      %v281 = vld [vmem:[%s2 + $0xec] sm:$0xf]
      %v282 = vld [vmem:[%s2 + $0xf0] sm:$0xff]
      %v283 = vld [vmem:[%s2 + $0xf8] sm:$0xff]
      %v284 = vld [vmem:[%s2 + $0x100] sm:$0xf]
      %v285 = vld [vmem:[%s2 + $0x104] sm:$0xff]
      %v286 = vld [vmem:[%s2 + $0x10c] sm:$0xff]
      %v287 = vld [vmem:[%s2 + $0x114] sm:$0xf]
      %v288 = vld [vmem:[%s2 + $0x118] sm:$0xff]
      %v289 = vld [vmem:[%s2 + $0x120] sm:$0xff]
      %v290 = vld [vmem:[%s2 + $0x128] sm:$0xf]
      %v291 = vld [vmem:[%s2 + $0x12c] sm:$0xff]
      %v292 = vld [vmem:[%s2 + $0x134] sm:$0xff]
      %v293 = vld [vmem:[%s2 + $0x13c] sm:$0xf]
      %v294 = vld [vmem:[%s214] sm:$0xff]
      %v295 = vld [vmem:[%s214 + $0x8] sm:$0xff]
      %v296 = vpack.c.bf16 %v295, %v294
      %v297 = vld [vmem:[%s223] sm:$0xff]
      %v298 = vld [vmem:[%s223 + $0x8] sm:$0xff]
      %v299 = vpack.c.bf16 %v298, %v297
      %v300 = vld [vmem:[%s2 + $0x140] sm:$0xff]
      %v301 = vld [vmem:[%s2 + $0x148] sm:$0xff]
      %v302 = vld [vmem:[%s2 + $0x150] sm:$0xf]
      %v303 = vld [vmem:[%s2 + $0x154] sm:$0xff]
      %v304 = vld [vmem:[%s2 + $0x15c] sm:$0xff]
      %v305 = vld [vmem:[%s2 + $0x164] sm:$0xf]
      %v306 = vld [vmem:[%s2 + $0x168] sm:$0xff]
      %v307 = vld [vmem:[%s2 + $0x170] sm:$0xff]
      %v308 = vld [vmem:[%s2 + $0x178] sm:$0xf]
      %v309 = vld [vmem:[%s2 + $0x17c] sm:$0xff]
      %v310 = vld [vmem:[%s2 + $0x184] sm:$0xff]
      %v311 = vld [vmem:[%s2 + $0x18c] sm:$0xf]
      %v312 = vld [vmem:[%s2 + $0x190] sm:$0xff]
      %v313 = vld [vmem:[%s2 + $0x198] sm:$0xff]
      %v314 = vld [vmem:[%s2 + $0x1a0] sm:$0xf]
      %v315 = vld [vmem:[%s2 + $0x1a4] sm:$0xff]
      %v316 = vld [vmem:[%s2 + $0x1ac] sm:$0xff]
      %v317 = vld [vmem:[%s2 + $0x1b4] sm:$0xf]
      %v318 = vld [vmem:[%s2 + $0x1b8] sm:$0xff]
      %v319 = vld [vmem:[%s2 + $0x1c0] sm:$0xff]
      %v320 = vld [vmem:[%s2 + $0x1c8] sm:$0xf]
      %v321 = vld [vmem:[%s2 + $0x1cc] sm:$0xff]
      %v322 = vld [vmem:[%s2 + $0x1d4] sm:$0xff]
      %v323 = vld [vmem:[%s2 + $0x1dc] sm:$0xf]
      %v324 = vld [vmem:[%s2 + $0x1e0] sm:$0xff]
      %v325 = vld [vmem:[%s2 + $0x1e8] sm:$0xff]
      %v326 = vld [vmem:[%s2 + $0x1f0] sm:$0xf]
      %v327 = vld [vmem:[%s2 + $0x1f4] sm:$0xff]
      %v328 = vld [vmem:[%s2 + $0x1fc] sm:$0xff]
      %v329 = vld [vmem:[%s2 + $0x204] sm:$0xf]
      %v330 = vld [vmem:[%s2 + $0x208] sm:$0xff]
      %v331 = vld [vmem:[%s2 + $0x210] sm:$0xff]
      %v332 = vld [vmem:[%s2 + $0x218] sm:$0xf]
      %v333 = vld [vmem:[%s2 + $0x21c] sm:$0xff]
      %v334 = vld [vmem:[%s2 + $0x224] sm:$0xff]
      %v335 = vld [vmem:[%s2 + $0x22c] sm:$0xf]
      %v336 = vld [vmem:[%s2 + $0x230] sm:$0xff]
      %v337 = vld [vmem:[%s2 + $0x238] sm:$0xff]
      %v338 = vld [vmem:[%s2 + $0x240] sm:$0xf]
      %v339 = vld [vmem:[%s2 + $0x244] sm:$0xff]
      %v340 = vld [vmem:[%s2 + $0x24c] sm:$0xff]
      %v341 = vld [vmem:[%s2 + $0x254] sm:$0xf]
      %v342 = vld [vmem:[%s2 + $0x258] sm:$0xff]
      %v343 = vld [vmem:[%s2 + $0x260] sm:$0xff]
      %v344 = vld [vmem:[%s2 + $0x268] sm:$0xf]
      %v345 = vld [vmem:[%s2 + $0x26c] sm:$0xff]
      %v346 = vld [vmem:[%s2 + $0x274] sm:$0xff]
      %v347 = vld [vmem:[%s2 + $0x27c] sm:$0xf]
      %v348 = vld [vmem:[%s214 + $0x1] sm:$0xff]
      %v349 = vld [vmem:[%s214 + $0x9] sm:$0xff]
      %v350 = vpack.c.bf16 %v349, %v348
      %v351 = vld [vmem:[%s223 + $0x1] sm:$0xff]
      %v352 = vld [vmem:[%s223 + $0x9] sm:$0xff]
      %v353 = vpack.c.bf16 %v352, %v351
      %v402 = vunpack.c.l.b16 %v300
      %v403 = vunpack.c.h.b16 %v300
      %v404 = vunpack.c.l.b16 %v301
      %v405 = vunpack.c.h.b16 %v301
      %v406 = vunpack.c.l.b16 %v302
      %v407 = vunpack.c.l.b16 %v303
      %v408 = vunpack.c.h.b16 %v303
      %v409 = vunpack.c.l.b16 %v304
      %v410 = vunpack.c.h.b16 %v304
      %v411 = vunpack.c.l.b16 %v305
      %v412 = vunpack.c.l.b16 %v306
      %v413 = vunpack.c.h.b16 %v306
      %v414 = vunpack.c.l.b16 %v307
      %v415 = vunpack.c.h.b16 %v307
      %v416 = vunpack.c.l.b16 %v308
      %v417 = vunpack.c.l.b16 %v309
      %v418 = vunpack.c.h.b16 %v309
      %v419 = vunpack.c.l.b16 %v310
      %v420 = vunpack.c.h.b16 %v310
      %v421 = vunpack.c.l.b16 %v311
      %v422 = vunpack.c.l.b16 %v312
      %v423 = vunpack.c.h.b16 %v312
      %v424 = vunpack.c.l.b16 %v313
      %v425 = vunpack.c.h.b16 %v313
      %v426 = vunpack.c.l.b16 %v314
      %v427 = vunpack.c.l.b16 %v315
      %v428 = vunpack.c.h.b16 %v315
      %v429 = vunpack.c.l.b16 %v316
      %v430 = vunpack.c.h.b16 %v316
      %v431 = vunpack.c.l.b16 %v317
      %v432 = vunpack.c.l.b16 %v318
      %v433 = vunpack.c.h.b16 %v318
      %v434 = vunpack.c.l.b16 %v319
      %v435 = vunpack.c.h.b16 %v319
      %v436 = vunpack.c.l.b16 %v320
      %v437 = vunpack.c.l.b16 %v321
      %v438 = vunpack.c.h.b16 %v321
      %v439 = vunpack.c.l.b16 %v322
      %v440 = vunpack.c.h.b16 %v322
      %v441 = vunpack.c.l.b16 %v323
      %v442 = vunpack.c.l.b16 %v324
      %v443 = vunpack.c.h.b16 %v324
      %v444 = vunpack.c.l.b16 %v325
      %v445 = vunpack.c.h.b16 %v325
      %v446 = vunpack.c.l.b16 %v326
      %v447 = vunpack.c.l.b16 %v327
      %v448 = vunpack.c.h.b16 %v327
      %v449 = vunpack.c.l.b16 %v328
      %v450 = vunpack.c.h.b16 %v328
      %v451 = vunpack.c.l.b16 %v329
      %v452 = vunpack.c.l.b16 %v330
      %v453 = vunpack.c.h.b16 %v330
      %v454 = vunpack.c.l.b16 %v331
      %v455 = vunpack.c.h.b16 %v331
      %v456 = vunpack.c.l.b16 %v332
      %v457 = vunpack.c.l.b16 %v333
      %v458 = vunpack.c.h.b16 %v333
      %v459 = vunpack.c.l.b16 %v334
      %v460 = vunpack.c.h.b16 %v334
      %v461 = vunpack.c.l.b16 %v335
      %v462 = vunpack.c.l.b16 %v336
      %v463 = vunpack.c.h.b16 %v336
      %v464 = vunpack.c.l.b16 %v337
      %v465 = vunpack.c.h.b16 %v337
      %v466 = vunpack.c.l.b16 %v338
      %v467 = vunpack.c.l.b16 %v339
      %v468 = vunpack.c.h.b16 %v339
      %v469 = vunpack.c.l.b16 %v340
      %v470 = vunpack.c.h.b16 %v340
      %v471 = vunpack.c.l.b16 %v341
      %v472 = vunpack.c.l.b16 %v342
      %v473 = vunpack.c.h.b16 %v342
      %v474 = vunpack.c.l.b16 %v343
      %v475 = vunpack.c.h.b16 %v343
      %v476 = vunpack.c.l.b16 %v344
      %v477 = vunpack.c.l.b16 %v345
      %v478 = vunpack.c.h.b16 %v345
      %v479 = vunpack.c.l.b16 %v346
      %v480 = vunpack.c.h.b16 %v346
      %v481 = vunpack.c.l.b16 %v347
      %v482 = vpack.c.b16 %v407, %v402
      %v483 = vpack.c.b16 %v408, %v403
      %v484 = vpack.c.b16 %v409, %v404
      %v485 = vpack.c.b16 %v410, %v405
      %v486 = vpack.c.b16 %v411, %v406
      %v487 = vpack.c.b16 %v417, %v412
      %v488 = vpack.c.b16 %v418, %v413
      %v489 = vpack.c.b16 %v419, %v414
      %v490 = vpack.c.b16 %v420, %v415
      %v491 = vpack.c.b16 %v421, %v416
      %v492 = vpack.c.b16 %v427, %v422
      %v493 = vpack.c.b16 %v428, %v423
      %v494 = vpack.c.b16 %v429, %v424
      %v495 = vpack.c.b16 %v430, %v425
      %v496 = vpack.c.b16 %v431, %v426
      %v497 = vpack.c.b16 %v437, %v432
      %v498 = vpack.c.b16 %v438, %v433
      %v499 = vpack.c.b16 %v439, %v434
      %v500 = vpack.c.b16 %v440, %v435
      %v501 = vpack.c.b16 %v441, %v436
      %v502 = vpack.c.b16 %v447, %v442
      %v503 = vpack.c.b16 %v448, %v443
      %v504 = vpack.c.b16 %v449, %v444
      %v505 = vpack.c.b16 %v450, %v445
      %v506 = vpack.c.b16 %v451, %v446
      %v507 = vpack.c.b16 %v457, %v452
      %v508 = vpack.c.b16 %v458, %v453
      %v509 = vpack.c.b16 %v459, %v454
      %v510 = vpack.c.b16 %v460, %v455
      %v511 = vpack.c.b16 %v461, %v456
      %v512 = vpack.c.b16 %v467, %v462
      %v513 = vpack.c.b16 %v468, %v463
      %v514 = vpack.c.b16 %v469, %v464
      %v515 = vpack.c.b16 %v470, %v465
      %v516 = vpack.c.b16 %v471, %v466
      %v517 = vpack.c.b16 %v477, %v472
      %v518 = vpack.c.b16 %v478, %v473
      %v519 = vpack.c.b16 %v479, %v474
      %v520 = vpack.c.b16 %v480, %v475
      %v521 = vpack.c.b16 %v481, %v476
      %562 = vmatprep.subr.bf16.mxu0 %v518
      %563 = vmatpush1.bf16.msra.mxu0 %v517
      %564 = vmatprep.subr.bf16.mxu0 %v513
      %565 = vmatpush1.bf16.msra.mxu0 %v512
      %566 = vmatprep.subr.bf16.mxu0 %v508
      %567 = vmatpush1.bf16.msra.mxu0 %v507
      %568 = vmatprep.subr.bf16.mxu0 %v503
      %569 = vmatpush1.bf16.msra.mxu0 %v502
      %570 = vmatprep.subr.bf16.mxu0 %v498
      %571 = vmatpush1.bf16.msra.mxu0 %v497
      %572 = vmatprep.subr.bf16.mxu0 %v493
      %573 = vmatpush1.bf16.msra.mxu0 %v492
      %574 = vmatprep.subr.bf16.mxu0 %v488
      %575 = vmatpush1.bf16.msra.mxu0 %v487
      %576 = vmatprep.subr.bf16.mxu0 %v483
      %577 = vmatpush1.bf16.msra.mxu0 %v482
      %578 = vmatprep.subr.bf16.mxu0 0
      %579 = vmatpush2.bf16.msra.mxu0 0
      %580 = vmatprep.subr.bf16.mxu0 0
      %581 = vmatpush2.bf16.msra.mxu0 0
      %582 = vmatprep.subr.bf16.mxu0 0
      %583 = vmatpush2.bf16.msra.mxu0 0
      %584 = vmatprep.subr.bf16.mxu0 0
      %585 = vmatpush2.bf16.msra.mxu0 0
      %586 = vmatprep.subr.bf16.mxu0 0
      %587 = vmatpush2.bf16.msra.mxu0 0
      %588 = vmatprep.subr.bf16.mxu0 0
      %589 = vmatpush2.bf16.msra.mxu0 0
      %590 = vmatprep.subr.bf16.mxu0 0
      %591 = vmatpush2.bf16.msra.mxu0 0
      %592 = vmatprep.subr.bf16.mxu0 0
      %593 = vmatpush2.bf16.msra.mxu0 0
      %594 = vmatprep.mubr.bf16.mxu0 0
      %595 = vmatmul.mubr.bf16.gmra.mxu0 %v350
      %v596 = vpop.f32.mrf.mxu0
      %v597 = vadd.f32 0.0, %v596
      %v598 = vpop.f32.mrf.mxu0
      %v599 = vadd.f32 0.0, %v598
      %v600 = vpop.f32.mrf.mxu0
      %v601 = vadd.f32 0.0, %v600
      %v602 = vpop.f32.mrf.mxu0
      %v603 = vadd.f32 0.0, %v602
      %604 = vdwg.mxu0
      %605 = vmatprep.subr.bf16.mxu0 %v520
      %606 = vmatpush1.bf16.msra.mxu0 %v519
      %607 = vmatprep.subr.bf16.mxu0 %v515
      %608 = vmatpush1.bf16.msra.mxu0 %v514
      %609 = vmatprep.subr.bf16.mxu0 %v510
      %610 = vmatpush1.bf16.msra.mxu0 %v509
      %611 = vmatprep.subr.bf16.mxu0 %v505
      %612 = vmatpush1.bf16.msra.mxu0 %v504
      %613 = vmatprep.subr.bf16.mxu0 %v500
      %614 = vmatpush1.bf16.msra.mxu0 %v499
      %615 = vmatprep.subr.bf16.mxu0 %v495
      %616 = vmatpush1.bf16.msra.mxu0 %v494
      %617 = vmatprep.subr.bf16.mxu0 %v490
      %618 = vmatpush1.bf16.msra.mxu0 %v489
      %619 = vmatprep.subr.bf16.mxu0 %v485
      %620 = vmatpush1.bf16.msra.mxu0 %v484
      %621 = vmatprep.subr.bf16.mxu0 0
      %622 = vmatpush2.bf16.msra.mxu0 0
      %623 = vmatprep.subr.bf16.mxu0 0
      %624 = vmatpush2.bf16.msra.mxu0 0
      %625 = vmatprep.subr.bf16.mxu0 0
      %626 = vmatpush2.bf16.msra.mxu0 0
      %627 = vmatprep.subr.bf16.mxu0 0
      %628 = vmatpush2.bf16.msra.mxu0 0
      %629 = vmatprep.subr.bf16.mxu0 0
      %630 = vmatpush2.bf16.msra.mxu0 0
      %631 = vmatprep.subr.bf16.mxu0 0
      %632 = vmatpush2.bf16.msra.mxu0 0
      %633 = vmatprep.subr.bf16.mxu0 0
      %634 = vmatpush2.bf16.msra.mxu0 0
      %635 = vmatprep.subr.bf16.mxu0 0
      %636 = vmatpush2.bf16.msra.mxu0 0
      %637 = vmatprep.mubr.bf16.mxu0 0
      %638 = vmatmul.mubr.bf16.gmra.mxu0 %v350
      %v639 = vpop.f32.mrf.mxu0
      %v640 = vadd.f32 0.0, %v639
      %v641 = vpop.f32.mrf.mxu0
      %v642 = vadd.f32 0.0, %v641
      %v643 = vpop.f32.mrf.mxu0
      %v644 = vadd.f32 0.0, %v643
      %v645 = vpop.f32.mrf.mxu0
      %v646 = vadd.f32 0.0, %v645
      %647 = vdwg.mxu0
      %648 = vmatprep.subr.bf16.mxu0 0
      %649 = vmatpush1.bf16.msra.mxu0 %v521
      %650 = vmatprep.subr.bf16.mxu0 0
      %651 = vmatpush1.bf16.msra.mxu0 %v516
      %652 = vmatprep.subr.bf16.mxu0 0
      %653 = vmatpush1.bf16.msra.mxu0 %v511
      %654 = vmatprep.subr.bf16.mxu0 0
      %655 = vmatpush1.bf16.msra.mxu0 %v506
      %656 = vmatprep.subr.bf16.mxu0 0
      %657 = vmatpush1.bf16.msra.mxu0 %v501
      %658 = vmatprep.subr.bf16.mxu0 0
      %659 = vmatpush1.bf16.msra.mxu0 %v496
      %660 = vmatprep.subr.bf16.mxu0 0
      %661 = vmatpush1.bf16.msra.mxu0 %v491
      %662 = vmatprep.subr.bf16.mxu0 0
      %663 = vmatpush1.bf16.msra.mxu0 %v486
      %664 = vmatprep.subr.bf16.mxu0 0
      %665 = vmatpush2.bf16.msra.mxu0 0
      %666 = vmatprep.subr.bf16.mxu0 0
      %667 = vmatpush2.bf16.msra.mxu0 0
      %668 = vmatprep.subr.bf16.mxu0 0
      %669 = vmatpush2.bf16.msra.mxu0 0
      %670 = vmatprep.subr.bf16.mxu0 0
      %671 = vmatpush2.bf16.msra.mxu0 0
      %672 = vmatprep.subr.bf16.mxu0 0
      %673 = vmatpush2.bf16.msra.mxu0 0
      %674 = vmatprep.subr.bf16.mxu0 0
      %675 = vmatpush2.bf16.msra.mxu0 0
      %676 = vmatprep.subr.bf16.mxu0 0
      %677 = vmatpush2.bf16.msra.mxu0 0
      %678 = vmatprep.subr.bf16.mxu0 0
      %679 = vmatpush2.bf16.msra.mxu0 0
      %680 = vmatprep.mubr.bf16.mxu0 0
      %681 = vmatmul.mubr.bf16.gmra.mxu0 %v350
      %v682 = vpop.f32.mrf.mxu0
      %v683 = vadd.f32 0.0, %v682
      %v684 = vpop.f32.mrf.mxu0
      %v685 = vpop.f32.mrf.mxu0
      %v686 = vadd.f32 0.0, %v685
      %v687 = vpop.f32.mrf.mxu0
      %688 = vdwg.mxu0
      %v737 = vunpack.c.l.b16 %v246
      %v738 = vunpack.c.h.b16 %v246
      %v739 = vunpack.c.l.b16 %v247
      %v740 = vunpack.c.h.b16 %v247
      %v741 = vunpack.c.l.b16 %v248
      %v742 = vunpack.c.l.b16 %v249
      %v743 = vunpack.c.h.b16 %v249
      %v744 = vunpack.c.l.b16 %v250
      %v745 = vunpack.c.h.b16 %v250
      %v746 = vunpack.c.l.b16 %v251
      %v747 = vunpack.c.l.b16 %v252
      %v748 = vunpack.c.h.b16 %v252
      %v749 = vunpack.c.l.b16 %v253
      %v750 = vunpack.c.h.b16 %v253
      %v751 = vunpack.c.l.b16 %v254
      %v752 = vunpack.c.l.b16 %v255
      %v753 = vunpack.c.h.b16 %v255
      %v754 = vunpack.c.l.b16 %v256
      %v755 = vunpack.c.h.b16 %v256
      %v756 = vunpack.c.l.b16 %v257
      %v757 = vunpack.c.l.b16 %v258
      %v758 = vunpack.c.h.b16 %v258
      %v759 = vunpack.c.l.b16 %v259
      %v760 = vunpack.c.h.b16 %v259
      %v761 = vunpack.c.l.b16 %v260
      %v762 = vunpack.c.l.b16 %v261
      %v763 = vunpack.c.h.b16 %v261
      %v764 = vunpack.c.l.b16 %v262
      %v765 = vunpack.c.h.b16 %v262
      %v766 = vunpack.c.l.b16 %v263
      %v767 = vunpack.c.l.b16 %v264
      %v768 = vunpack.c.h.b16 %v264
      %v769 = vunpack.c.l.b16 %v265
      %v770 = vunpack.c.h.b16 %v265
      %v771 = vunpack.c.l.b16 %v266
      %v772 = vunpack.c.l.b16 %v267
      %v773 = vunpack.c.h.b16 %v267
      %v774 = vunpack.c.l.b16 %v268
      %v775 = vunpack.c.h.b16 %v268
      %v776 = vunpack.c.l.b16 %v269
      %v777 = vunpack.c.l.b16 %v270
      %v778 = vunpack.c.h.b16 %v270
      %v779 = vunpack.c.l.b16 %v271
      %v780 = vunpack.c.h.b16 %v271
      %v781 = vunpack.c.l.b16 %v272
      %v782 = vunpack.c.l.b16 %v273
      %v783 = vunpack.c.h.b16 %v273
      %v784 = vunpack.c.l.b16 %v274
      %v785 = vunpack.c.h.b16 %v274
      %v786 = vunpack.c.l.b16 %v275
      %v787 = vunpack.c.l.b16 %v276
      %v788 = vunpack.c.h.b16 %v276
      %v789 = vunpack.c.l.b16 %v277
      %v790 = vunpack.c.h.b16 %v277
      %v791 = vunpack.c.l.b16 %v278
      %v792 = vunpack.c.l.b16 %v279
      %v793 = vunpack.c.h.b16 %v279
      %v794 = vunpack.c.l.b16 %v280
      %v795 = vunpack.c.h.b16 %v280
      %v796 = vunpack.c.l.b16 %v281
      %v797 = vunpack.c.l.b16 %v282
      %v798 = vunpack.c.h.b16 %v282
      %v799 = vunpack.c.l.b16 %v283
      %v800 = vunpack.c.h.b16 %v283
      %v801 = vunpack.c.l.b16 %v284
      %v802 = vunpack.c.l.b16 %v285
      %v803 = vunpack.c.h.b16 %v285
      %v804 = vunpack.c.l.b16 %v286
      %v805 = vunpack.c.h.b16 %v286
      %v806 = vunpack.c.l.b16 %v287
      %v807 = vunpack.c.l.b16 %v288
      %v808 = vunpack.c.h.b16 %v288
      %v809 = vunpack.c.l.b16 %v289
      %v810 = vunpack.c.h.b16 %v289
      %v811 = vunpack.c.l.b16 %v290
      %v812 = vunpack.c.l.b16 %v291
      %v813 = vunpack.c.h.b16 %v291
      %v814 = vunpack.c.l.b16 %v292
      %v815 = vunpack.c.h.b16 %v292
      %v816 = vunpack.c.l.b16 %v293
      %v817 = vpack.c.b16 %v742, %v737
      %v818 = vpack.c.b16 %v743, %v738
      %v819 = vpack.c.b16 %v744, %v739
      %v820 = vpack.c.b16 %v745, %v740
      %v821 = vpack.c.b16 %v746, %v741
      %v822 = vpack.c.b16 %v752, %v747
      %v823 = vpack.c.b16 %v753, %v748
      %v824 = vpack.c.b16 %v754, %v749
      %v825 = vpack.c.b16 %v755, %v750
      %v826 = vpack.c.b16 %v756, %v751
      %v827 = vpack.c.b16 %v762, %v757
      %v828 = vpack.c.b16 %v763, %v758
      %v829 = vpack.c.b16 %v764, %v759
      %v830 = vpack.c.b16 %v765, %v760
      %v831 = vpack.c.b16 %v766, %v761
      %v832 = vpack.c.b16 %v772, %v767
      %v833 = vpack.c.b16 %v773, %v768
      %v834 = vpack.c.b16 %v774, %v769
      %v835 = vpack.c.b16 %v775, %v770
      %v836 = vpack.c.b16 %v776, %v771
      %v837 = vpack.c.b16 %v782, %v777
      %v838 = vpack.c.b16 %v783, %v778
      %v839 = vpack.c.b16 %v784, %v779
      %v840 = vpack.c.b16 %v785, %v780
      %v841 = vpack.c.b16 %v786, %v781
      %v842 = vpack.c.b16 %v792, %v787
      %v843 = vpack.c.b16 %v793, %v788
      %v844 = vpack.c.b16 %v794, %v789
      %v845 = vpack.c.b16 %v795, %v790
      %v846 = vpack.c.b16 %v796, %v791
      %v847 = vpack.c.b16 %v802, %v797
      %v848 = vpack.c.b16 %v803, %v798
      %v849 = vpack.c.b16 %v804, %v799
      %v850 = vpack.c.b16 %v805, %v800
      %v851 = vpack.c.b16 %v806, %v801
      %v852 = vpack.c.b16 %v812, %v807
      %v853 = vpack.c.b16 %v813, %v808
      %v854 = vpack.c.b16 %v814, %v809
      %v855 = vpack.c.b16 %v815, %v810
      %v856 = vpack.c.b16 %v816, %v811
      %897 = vmatprep.subr.bf16.mxu0 %v853
      %898 = vmatpush1.bf16.msra.mxu0 %v852
      %899 = vmatprep.subr.bf16.mxu0 %v848
      %900 = vmatpush1.bf16.msra.mxu0 %v847
      %901 = vmatprep.subr.bf16.mxu0 %v843
      %902 = vmatpush1.bf16.msra.mxu0 %v842
      %903 = vmatprep.subr.bf16.mxu0 %v838
      %904 = vmatpush1.bf16.msra.mxu0 %v837
      %905 = vmatprep.subr.bf16.mxu0 %v833
      %906 = vmatpush1.bf16.msra.mxu0 %v832
      %907 = vmatprep.subr.bf16.mxu0 %v828
      %908 = vmatpush1.bf16.msra.mxu0 %v827
      %909 = vmatprep.subr.bf16.mxu0 %v823
      %910 = vmatpush1.bf16.msra.mxu0 %v822
      %911 = vmatprep.subr.bf16.mxu0 %v818
      %912 = vmatpush1.bf16.msra.mxu0 %v817
      %913 = vmatprep.subr.bf16.mxu0 0
      %914 = vmatpush2.bf16.msra.mxu0 0
      %915 = vmatprep.subr.bf16.mxu0 0
      %916 = vmatpush2.bf16.msra.mxu0 0
      %917 = vmatprep.subr.bf16.mxu0 0
      %918 = vmatpush2.bf16.msra.mxu0 0
      %919 = vmatprep.subr.bf16.mxu0 0
      %920 = vmatpush2.bf16.msra.mxu0 0
      %921 = vmatprep.subr.bf16.mxu0 0
      %922 = vmatpush2.bf16.msra.mxu0 0
      %923 = vmatprep.subr.bf16.mxu0 0
      %924 = vmatpush2.bf16.msra.mxu0 0
      %925 = vmatprep.subr.bf16.mxu0 0
      %926 = vmatpush2.bf16.msra.mxu0 0
      %927 = vmatprep.subr.bf16.mxu0 0
      %928 = vmatpush2.bf16.msra.mxu0 0
      %929 = vmatprep.mubr.bf16.mxu0 0
      %930 = vmatmul.mubr.bf16.gmra.mxu0 %v296
      %v931 = vpop.f32.mrf.mxu0
      %v932 = vadd.f32 %v597, %v931
      %v933 = vpop.f32.mrf.mxu0
      %v934 = vadd.f32 %v599, %v933
      %v935 = vpop.f32.mrf.mxu0
      %v936 = vadd.f32 %v601, %v935
      %v937 = vpop.f32.mrf.mxu0
      %v938 = vadd.f32 %v603, %v937
      %939 = vdwg.mxu0
      %940 = vmatprep.subr.bf16.mxu0 %v855
      %941 = vmatpush1.bf16.msra.mxu0 %v854
      %942 = vmatprep.subr.bf16.mxu0 %v850
      %943 = vmatpush1.bf16.msra.mxu0 %v849
      %944 = vmatprep.subr.bf16.mxu0 %v845
      %945 = vmatpush1.bf16.msra.mxu0 %v844
      %946 = vmatprep.subr.bf16.mxu0 %v840
      %947 = vmatpush1.bf16.msra.mxu0 %v839
      %948 = vmatprep.subr.bf16.mxu0 %v835
      %949 = vmatpush1.bf16.msra.mxu0 %v834
      %950 = vmatprep.subr.bf16.mxu0 %v830
      %951 = vmatpush1.bf16.msra.mxu0 %v829
      %952 = vmatprep.subr.bf16.mxu0 %v825
      %953 = vmatpush1.bf16.msra.mxu0 %v824
      %954 = vmatprep.subr.bf16.mxu0 %v820
      %955 = vmatpush1.bf16.msra.mxu0 %v819
      %956 = vmatprep.subr.bf16.mxu0 0
      %957 = vmatpush2.bf16.msra.mxu0 0
      %958 = vmatprep.subr.bf16.mxu0 0
      %959 = vmatpush2.bf16.msra.mxu0 0
      %960 = vmatprep.subr.bf16.mxu0 0
      %961 = vmatpush2.bf16.msra.mxu0 0
      %962 = vmatprep.subr.bf16.mxu0 0
      %963 = vmatpush2.bf16.msra.mxu0 0
      %964 = vmatprep.subr.bf16.mxu0 0
      %965 = vmatpush2.bf16.msra.mxu0 0
      %966 = vmatprep.subr.bf16.mxu0 0
      %967 = vmatpush2.bf16.msra.mxu0 0
      %968 = vmatprep.subr.bf16.mxu0 0
      %969 = vmatpush2.bf16.msra.mxu0 0
      %970 = vmatprep.subr.bf16.mxu0 0
      %971 = vmatpush2.bf16.msra.mxu0 0
      %972 = vmatprep.mubr.bf16.mxu0 0
      %973 = vmatmul.mubr.bf16.gmra.mxu0 %v296
      %v974 = vpop.f32.mrf.mxu0
      %v975 = vadd.f32 %v640, %v974
      %v976 = vpop.f32.mrf.mxu0
      %v977 = vadd.f32 %v642, %v976
      %v978 = vpop.f32.mrf.mxu0
      %v979 = vadd.f32 %v644, %v978
      %v980 = vpop.f32.mrf.mxu0
      %v981 = vadd.f32 %v646, %v980
      %982 = vdwg.mxu0
      %983 = vmatprep.subr.bf16.mxu0 0
      %984 = vmatpush1.bf16.msra.mxu0 %v856
      %985 = vmatprep.subr.bf16.mxu0 0
      %986 = vmatpush1.bf16.msra.mxu0 %v851
      %987 = vmatprep.subr.bf16.mxu0 0
      %988 = vmatpush1.bf16.msra.mxu0 %v846
      %989 = vmatprep.subr.bf16.mxu0 0
      %990 = vmatpush1.bf16.msra.mxu0 %v841
      %991 = vmatprep.subr.bf16.mxu0 0
      %992 = vmatpush1.bf16.msra.mxu0 %v836
      %993 = vmatprep.subr.bf16.mxu0 0
      %994 = vmatpush1.bf16.msra.mxu0 %v831
      %995 = vmatprep.subr.bf16.mxu0 0
      %996 = vmatpush1.bf16.msra.mxu0 %v826
      %997 = vmatprep.subr.bf16.mxu0 0
      %998 = vmatpush1.bf16.msra.mxu0 %v821
      %999 = vmatprep.subr.bf16.mxu0 0
      %1000 = vmatpush2.bf16.msra.mxu0 0
      %1001 = vmatprep.subr.bf16.mxu0 0
      %1002 = vmatpush2.bf16.msra.mxu0 0
      %1003 = vmatprep.subr.bf16.mxu0 0
      %1004 = vmatpush2.bf16.msra.mxu0 0
      %1005 = vmatprep.subr.bf16.mxu0 0
      %1006 = vmatpush2.bf16.msra.mxu0 0
      %1007 = vmatprep.subr.bf16.mxu0 0
      %1008 = vmatpush2.bf16.msra.mxu0 0
      %1009 = vmatprep.subr.bf16.mxu0 0
      %1010 = vmatpush2.bf16.msra.mxu0 0
      %1011 = vmatprep.subr.bf16.mxu0 0
      %1012 = vmatpush2.bf16.msra.mxu0 0
      %1013 = vmatprep.subr.bf16.mxu0 0
      %1014 = vmatpush2.bf16.msra.mxu0 0
      %1015 = vmatprep.mubr.bf16.mxu0 0
      %1016 = vmatmul.mubr.bf16.gmra.mxu0 %v296
      %v1017 = vpop.f32.mrf.mxu0
      %v1018 = vadd.f32 %v683, %v1017
      %v1019 = vpop.f32.mrf.mxu0
      %v1020 = vpop.f32.mrf.mxu0
      %v1021 = vadd.f32 %v686, %v1020
      %v1022 = vpop.f32.mrf.mxu0
      %1023 = vdwg.mxu0
      %1024 = vmatprep.subr.bf16.mxu0 %v518
      %1025 = vmatpush1.bf16.msra.mxu0 %v517
      %1026 = vmatprep.subr.bf16.mxu0 %v513
      %1027 = vmatpush1.bf16.msra.mxu0 %v512
      %1028 = vmatprep.subr.bf16.mxu0 %v508
      %1029 = vmatpush1.bf16.msra.mxu0 %v507
      %1030 = vmatprep.subr.bf16.mxu0 %v503
      %1031 = vmatpush1.bf16.msra.mxu0 %v502
      %1032 = vmatprep.subr.bf16.mxu0 %v498
      %1033 = vmatpush1.bf16.msra.mxu0 %v497
      %1034 = vmatprep.subr.bf16.mxu0 %v493
      %1035 = vmatpush1.bf16.msra.mxu0 %v492
      %1036 = vmatprep.subr.bf16.mxu0 %v488
      %1037 = vmatpush1.bf16.msra.mxu0 %v487
      %1038 = vmatprep.subr.bf16.mxu0 %v483
      %1039 = vmatpush1.bf16.msra.mxu0 %v482
      %1040 = vmatprep.subr.bf16.mxu0 0
      %1041 = vmatpush2.bf16.msra.mxu0 0
      %1042 = vmatprep.subr.bf16.mxu0 0
      %1043 = vmatpush2.bf16.msra.mxu0 0
      %1044 = vmatprep.subr.bf16.mxu0 0
      %1045 = vmatpush2.bf16.msra.mxu0 0
      %1046 = vmatprep.subr.bf16.mxu0 0
      %1047 = vmatpush2.bf16.msra.mxu0 0
      %1048 = vmatprep.subr.bf16.mxu0 0
      %1049 = vmatpush2.bf16.msra.mxu0 0
      %1050 = vmatprep.subr.bf16.mxu0 0
      %1051 = vmatpush2.bf16.msra.mxu0 0
      %1052 = vmatprep.subr.bf16.mxu0 0
      %1053 = vmatpush2.bf16.msra.mxu0 0
      %1054 = vmatprep.subr.bf16.mxu0 0
      %1055 = vmatpush2.bf16.msra.mxu0 0
      %1056 = vmatprep.mubr.bf16.mxu0 0
      %1057 = vmatmul.mubr.bf16.gmra.mxu0 %v353
      %v1058 = vpop.f32.mrf.mxu0
      %v1059 = vadd.f32 0.0, %v1058
      %v1060 = vpop.f32.mrf.mxu0
      %v1061 = vadd.f32 0.0, %v1060
      %v1062 = vpop.f32.mrf.mxu0
      %v1063 = vadd.f32 0.0, %v1062
      %v1064 = vpop.f32.mrf.mxu0
      %v1065 = vadd.f32 0.0, %v1064
      %1066 = vdwg.mxu0
      %1067 = vmatprep.subr.bf16.mxu0 %v520
      %1068 = vmatpush1.bf16.msra.mxu0 %v519
      %1069 = vmatprep.subr.bf16.mxu0 %v515
      %1070 = vmatpush1.bf16.msra.mxu0 %v514
      %1071 = vmatprep.subr.bf16.mxu0 %v510
      %1072 = vmatpush1.bf16.msra.mxu0 %v509
      %1073 = vmatprep.subr.bf16.mxu0 %v505
      %1074 = vmatpush1.bf16.msra.mxu0 %v504
      %1075 = vmatprep.subr.bf16.mxu0 %v500
      %1076 = vmatpush1.bf16.msra.mxu0 %v499
      %1077 = vmatprep.subr.bf16.mxu0 %v495
      %1078 = vmatpush1.bf16.msra.mxu0 %v494
      %1079 = vmatprep.subr.bf16.mxu0 %v490
      %1080 = vmatpush1.bf16.msra.mxu0 %v489
      %1081 = vmatprep.subr.bf16.mxu0 %v485
      %1082 = vmatpush1.bf16.msra.mxu0 %v484
      %1083 = vmatprep.subr.bf16.mxu0 0
      %1084 = vmatpush2.bf16.msra.mxu0 0
      %1085 = vmatprep.subr.bf16.mxu0 0
      %1086 = vmatpush2.bf16.msra.mxu0 0
      %1087 = vmatprep.subr.bf16.mxu0 0
      %1088 = vmatpush2.bf16.msra.mxu0 0
      %1089 = vmatprep.subr.bf16.mxu0 0
      %1090 = vmatpush2.bf16.msra.mxu0 0
      %1091 = vmatprep.subr.bf16.mxu0 0
      %1092 = vmatpush2.bf16.msra.mxu0 0
      %1093 = vmatprep.subr.bf16.mxu0 0
      %1094 = vmatpush2.bf16.msra.mxu0 0
      %1095 = vmatprep.subr.bf16.mxu0 0
      %1096 = vmatpush2.bf16.msra.mxu0 0
      %1097 = vmatprep.subr.bf16.mxu0 0
      %1098 = vmatpush2.bf16.msra.mxu0 0
      %1099 = vmatprep.mubr.bf16.mxu0 0
      %1100 = vmatmul.mubr.bf16.gmra.mxu0 %v353
      %v1101 = vpop.f32.mrf.mxu0
      %v1102 = vadd.f32 0.0, %v1101
      %v1103 = vpop.f32.mrf.mxu0
      %v1104 = vadd.f32 0.0, %v1103
      %v1105 = vpop.f32.mrf.mxu0
      %v1106 = vadd.f32 0.0, %v1105
      %v1107 = vpop.f32.mrf.mxu0
      %v1108 = vadd.f32 0.0, %v1107
      %1109 = vdwg.mxu0
      %1110 = vmatprep.subr.bf16.mxu0 0
      %1111 = vmatpush1.bf16.msra.mxu0 %v521
      %1112 = vmatprep.subr.bf16.mxu0 0
      %1113 = vmatpush1.bf16.msra.mxu0 %v516
      %1114 = vmatprep.subr.bf16.mxu0 0
      %1115 = vmatpush1.bf16.msra.mxu0 %v511
      %1116 = vmatprep.subr.bf16.mxu0 0
      %1117 = vmatpush1.bf16.msra.mxu0 %v506
      %1118 = vmatprep.subr.bf16.mxu0 0
      %1119 = vmatpush1.bf16.msra.mxu0 %v501
      %1120 = vmatprep.subr.bf16.mxu0 0
      %1121 = vmatpush1.bf16.msra.mxu0 %v496
      %1122 = vmatprep.subr.bf16.mxu0 0
      %1123 = vmatpush1.bf16.msra.mxu0 %v491
      %1124 = vmatprep.subr.bf16.mxu0 0
      %1125 = vmatpush1.bf16.msra.mxu0 %v486
      %1126 = vmatprep.subr.bf16.mxu0 0
      %1127 = vmatpush2.bf16.msra.mxu0 0
      %1128 = vmatprep.subr.bf16.mxu0 0
      %1129 = vmatpush2.bf16.msra.mxu0 0
      %1130 = vmatprep.subr.bf16.mxu0 0
      %1131 = vmatpush2.bf16.msra.mxu0 0
      %1132 = vmatprep.subr.bf16.mxu0 0
      %1133 = vmatpush2.bf16.msra.mxu0 0
      %1134 = vmatprep.subr.bf16.mxu0 0
      %1135 = vmatpush2.bf16.msra.mxu0 0
      %1136 = vmatprep.subr.bf16.mxu0 0
      %1137 = vmatpush2.bf16.msra.mxu0 0
      %1138 = vmatprep.subr.bf16.mxu0 0
      %1139 = vmatpush2.bf16.msra.mxu0 0
      %1140 = vmatprep.subr.bf16.mxu0 0
      %1141 = vmatpush2.bf16.msra.mxu0 0
      %1142 = vmatprep.mubr.bf16.mxu0 0
      %1143 = vmatmul.mubr.bf16.gmra.mxu0 %v353
      %v1144 = vpop.f32.mrf.mxu0
      %v1145 = vadd.f32 0.0, %v1144
      %v1146 = vpop.f32.mrf.mxu0
      %v1147 = vpop.f32.mrf.mxu0
      %v1148 = vadd.f32 0.0, %v1147
      %v1149 = vpop.f32.mrf.mxu0
      %1150 = vdwg.mxu0
      %1151 = vmatprep.subr.bf16.mxu0 %v853
      %1152 = vmatpush1.bf16.msra.mxu0 %v852
      %1153 = vmatprep.subr.bf16.mxu0 %v848
      %1154 = vmatpush1.bf16.msra.mxu0 %v847
      %1155 = vmatprep.subr.bf16.mxu0 %v843
      %1156 = vmatpush1.bf16.msra.mxu0 %v842
      %1157 = vmatprep.subr.bf16.mxu0 %v838
      %1158 = vmatpush1.bf16.msra.mxu0 %v837
      %1159 = vmatprep.subr.bf16.mxu0 %v833
      %1160 = vmatpush1.bf16.msra.mxu0 %v832
      %1161 = vmatprep.subr.bf16.mxu0 %v828
      %1162 = vmatpush1.bf16.msra.mxu0 %v827
      %1163 = vmatprep.subr.bf16.mxu0 %v823
      %1164 = vmatpush1.bf16.msra.mxu0 %v822
      %1165 = vmatprep.subr.bf16.mxu0 %v818
      %1166 = vmatpush1.bf16.msra.mxu0 %v817
      %1167 = vmatprep.subr.bf16.mxu0 0
      %1168 = vmatpush2.bf16.msra.mxu0 0
      %1169 = vmatprep.subr.bf16.mxu0 0
      %1170 = vmatpush2.bf16.msra.mxu0 0
      %1171 = vmatprep.subr.bf16.mxu0 0
      %1172 = vmatpush2.bf16.msra.mxu0 0
      %1173 = vmatprep.subr.bf16.mxu0 0
      %1174 = vmatpush2.bf16.msra.mxu0 0
      %1175 = vmatprep.subr.bf16.mxu0 0
      %1176 = vmatpush2.bf16.msra.mxu0 0
      %1177 = vmatprep.subr.bf16.mxu0 0
      %1178 = vmatpush2.bf16.msra.mxu0 0
      %1179 = vmatprep.subr.bf16.mxu0 0
      %1180 = vmatpush2.bf16.msra.mxu0 0
      %1181 = vmatprep.subr.bf16.mxu0 0
      %1182 = vmatpush2.bf16.msra.mxu0 0
      %1183 = vmatprep.mubr.bf16.mxu0 0
      %1184 = vmatmul.mubr.bf16.gmra.mxu0 %v299
      %v1185 = vpop.f32.mrf.mxu0
      %v1186 = vadd.f32 %v1059, %v1185
      %v1187 = vpop.f32.mrf.mxu0
      %v1188 = vadd.f32 %v1061, %v1187
      %v1189 = vpop.f32.mrf.mxu0
      %v1190 = vadd.f32 %v1063, %v1189
      %v1191 = vpop.f32.mrf.mxu0
      %v1192 = vadd.f32 %v1065, %v1191
      %1193 = vdwg.mxu0
      %1194 = vmatprep.subr.bf16.mxu0 %v855
      %1195 = vmatpush1.bf16.msra.mxu0 %v854
      %1196 = vmatprep.subr.bf16.mxu0 %v850
      %1197 = vmatpush1.bf16.msra.mxu0 %v849
      %1198 = vmatprep.subr.bf16.mxu0 %v845
      %1199 = vmatpush1.bf16.msra.mxu0 %v844
      %1200 = vmatprep.subr.bf16.mxu0 %v840
      %1201 = vmatpush1.bf16.msra.mxu0 %v839
      %1202 = vmatprep.subr.bf16.mxu0 %v835
      %1203 = vmatpush1.bf16.msra.mxu0 %v834
      %1204 = vmatprep.subr.bf16.mxu0 %v830
      %1205 = vmatpush1.bf16.msra.mxu0 %v829
      %1206 = vmatprep.subr.bf16.mxu0 %v825
      %1207 = vmatpush1.bf16.msra.mxu0 %v824
      %1208 = vmatprep.subr.bf16.mxu0 %v820
      %1209 = vmatpush1.bf16.msra.mxu0 %v819
      %1210 = vmatprep.subr.bf16.mxu0 0
      %1211 = vmatpush2.bf16.msra.mxu0 0
      %1212 = vmatprep.subr.bf16.mxu0 0
      %1213 = vmatpush2.bf16.msra.mxu0 0
      %1214 = vmatprep.subr.bf16.mxu0 0
      %1215 = vmatpush2.bf16.msra.mxu0 0
      %1216 = vmatprep.subr.bf16.mxu0 0
      %1217 = vmatpush2.bf16.msra.mxu0 0
      %1218 = vmatprep.subr.bf16.mxu0 0
      %1219 = vmatpush2.bf16.msra.mxu0 0
      %1220 = vmatprep.subr.bf16.mxu0 0
      %1221 = vmatpush2.bf16.msra.mxu0 0
      %1222 = vmatprep.subr.bf16.mxu0 0
      %1223 = vmatpush2.bf16.msra.mxu0 0
      %1224 = vmatprep.subr.bf16.mxu0 0
      %1225 = vmatpush2.bf16.msra.mxu0 0
      %1226 = vmatprep.mubr.bf16.mxu0 0
      %1227 = vmatmul.mubr.bf16.gmra.mxu0 %v299
      %v1228 = vpop.f32.mrf.mxu0
      %v1229 = vadd.f32 %v1102, %v1228
      %v1230 = vpop.f32.mrf.mxu0
      %v1231 = vadd.f32 %v1104, %v1230
      %v1232 = vpop.f32.mrf.mxu0
      %v1233 = vadd.f32 %v1106, %v1232
      %v1234 = vpop.f32.mrf.mxu0
      %v1235 = vadd.f32 %v1108, %v1234
      %1236 = vdwg.mxu0
      %1237 = vmatprep.subr.bf16.mxu0 0
      %1238 = vmatpush1.bf16.msra.mxu0 %v856
      %1239 = vmatprep.subr.bf16.mxu0 0
      %1240 = vmatpush1.bf16.msra.mxu0 %v851
      %1241 = vmatprep.subr.bf16.mxu0 0
      %1242 = vmatpush1.bf16.msra.mxu0 %v846
      %1243 = vmatprep.subr.bf16.mxu0 0
      %1244 = vmatpush1.bf16.msra.mxu0 %v841
      %1245 = vmatprep.subr.bf16.mxu0 0
      %1246 = vmatpush1.bf16.msra.mxu0 %v836
      %1247 = vmatprep.subr.bf16.mxu0 0
      %1248 = vmatpush1.bf16.msra.mxu0 %v831
      %1249 = vmatprep.subr.bf16.mxu0 0
      %1250 = vmatpush1.bf16.msra.mxu0 %v826
      %1251 = vmatprep.subr.bf16.mxu0 0
      %1252 = vmatpush1.bf16.msra.mxu0 %v821
      %1253 = vmatprep.subr.bf16.mxu0 0
      %1254 = vmatpush2.bf16.msra.mxu0 0
      %1255 = vmatprep.subr.bf16.mxu0 0
      %1256 = vmatpush2.bf16.msra.mxu0 0
      %1257 = vmatprep.subr.bf16.mxu0 0
      %1258 = vmatpush2.bf16.msra.mxu0 0
      %1259 = vmatprep.subr.bf16.mxu0 0
      %1260 = vmatpush2.bf16.msra.mxu0 0
      %1261 = vmatprep.subr.bf16.mxu0 0
      %1262 = vmatpush2.bf16.msra.mxu0 0
      %1263 = vmatprep.subr.bf16.mxu0 0
      %1264 = vmatpush2.bf16.msra.mxu0 0
      %1265 = vmatprep.subr.bf16.mxu0 0
      %1266 = vmatpush2.bf16.msra.mxu0 0
      %1267 = vmatprep.subr.bf16.mxu0 0
      %1268 = vmatpush2.bf16.msra.mxu0 0
      %1269 = vmatprep.mubr.bf16.mxu0 0
      %1270 = vmatmul.mubr.bf16.gmra.mxu0 %v299
      %v1271 = vpop.f32.mrf.mxu0
      %v1272 = vadd.f32 %v1145, %v1271
      %v1273 = vpop.f32.mrf.mxu0
      %v1274 = vpop.f32.mrf.mxu0
      %v1275 = vadd.f32 %v1148, %v1274
      %v1276 = vpop.f32.mrf.mxu0
      %1277 = vdwg.mxu0
      %v1278 = vld [vmem:[%s2 + $0x280] sm:$0xff]
      %v1279 = vld [vmem:[%s2 + $0x288] sm:$0xff]
      %v1280 = vld [vmem:[%s2 + $0x290] sm:$0xf]
      %v1281 = vld [vmem:[%s2 + $0x294] sm:$0xff]
      %v1282 = vld [vmem:[%s2 + $0x29c] sm:$0xff]
      %v1283 = vld [vmem:[%s2 + $0x2a4] sm:$0xf]
      %v1284 = vld [vmem:[%s2 + $0x2a8] sm:$0xff]
      %v1285 = vld [vmem:[%s2 + $0x2b0] sm:$0xff]
      %v1286 = vld [vmem:[%s2 + $0x2b8] sm:$0xf]
      %v1287 = vld [vmem:[%s2 + $0x2bc] sm:$0xff]
      %v1288 = vld [vmem:[%s2 + $0x2c4] sm:$0xff]
      %v1289 = vld [vmem:[%s2 + $0x2cc] sm:$0xf]
      %v1290 = vld [vmem:[%s2 + $0x2d0] sm:$0xff]
      %v1291 = vld [vmem:[%s2 + $0x2d8] sm:$0xff]
      %v1292 = vld [vmem:[%s2 + $0x2e0] sm:$0xf]
      %v1293 = vld [vmem:[%s2 + $0x2e4] sm:$0xff]
      %v1294 = vld [vmem:[%s2 + $0x2ec] sm:$0xff]
      %v1295 = vld [vmem:[%s2 + $0x2f4] sm:$0xf]
      %v1296 = vld [vmem:[%s2 + $0x2f8] sm:$0xff]
      %v1297 = vld [vmem:[%s2 + $0x300] sm:$0xff]
      %v1298 = vld [vmem:[%s2 + $0x308] sm:$0xf]
      %v1299 = vld [vmem:[%s2 + $0x30c] sm:$0xff]
      %v1300 = vld [vmem:[%s2 + $0x314] sm:$0xff]
      %v1301 = vld [vmem:[%s2 + $0x31c] sm:$0xf]
      %v1302 = vld [vmem:[%s2 + $0x320] sm:$0xff]
      %v1303 = vld [vmem:[%s2 + $0x328] sm:$0xff]
      %v1304 = vld [vmem:[%s2 + $0x330] sm:$0xf]
      %v1305 = vld [vmem:[%s2 + $0x334] sm:$0xff]
      %v1306 = vld [vmem:[%s2 + $0x33c] sm:$0xff]
      %v1307 = vld [vmem:[%s2 + $0x344] sm:$0xf]
      %v1308 = vld [vmem:[%s2 + $0x348] sm:$0xff]
      %v1309 = vld [vmem:[%s2 + $0x350] sm:$0xff]
      %v1310 = vld [vmem:[%s2 + $0x358] sm:$0xf]
      %v1311 = vld [vmem:[%s2 + $0x35c] sm:$0xff]
      %v1312 = vld [vmem:[%s2 + $0x364] sm:$0xff]
      %v1313 = vld [vmem:[%s2 + $0x36c] sm:$0xf]
      %v1314 = vld [vmem:[%s2 + $0x370] sm:$0xff]
      %v1315 = vld [vmem:[%s2 + $0x378] sm:$0xff]
      %v1316 = vld [vmem:[%s2 + $0x380] sm:$0xf]
      %v1317 = vld [vmem:[%s2 + $0x384] sm:$0xff]
      %v1318 = vld [vmem:[%s2 + $0x38c] sm:$0xff]
      %v1319 = vld [vmem:[%s2 + $0x394] sm:$0xf]
      %v1320 = vld [vmem:[%s2 + $0x398] sm:$0xff]
      %v1321 = vld [vmem:[%s2 + $0x3a0] sm:$0xff]
      %v1322 = vld [vmem:[%s2 + $0x3a8] sm:$0xf]
      %v1323 = vld [vmem:[%s2 + $0x3ac] sm:$0xff]
      %v1324 = vld [vmem:[%s2 + $0x3b4] sm:$0xff]
      %v1325 = vld [vmem:[%s2 + $0x3bc] sm:$0xf]
      %v1326 = vld [vmem:[%s214 + $0x2] sm:$0xff]
      %v1327 = vld [vmem:[%s214 + $0xa] sm:$0xff]
      %v1328 = vpack.c.bf16 %v1327, %v1326
      %v1329 = vld [vmem:[%s223 + $0x2] sm:$0xff]
      %v1330 = vld [vmem:[%s223 + $0xa] sm:$0xff]
      %v1331 = vpack.c.bf16 %v1330, %v1329
      %v1380 = vunpack.c.l.b16 %v1278
      %v1381 = vunpack.c.h.b16 %v1278
      %v1382 = vunpack.c.l.b16 %v1279
      %v1383 = vunpack.c.h.b16 %v1279
      %v1384 = vunpack.c.l.b16 %v1280
      %v1385 = vunpack.c.l.b16 %v1281
      %v1386 = vunpack.c.h.b16 %v1281
      %v1387 = vunpack.c.l.b16 %v1282
      %v1388 = vunpack.c.h.b16 %v1282
      %v1389 = vunpack.c.l.b16 %v1283
      %v1390 = vunpack.c.l.b16 %v1284
      %v1391 = vunpack.c.h.b16 %v1284
      %v1392 = vunpack.c.l.b16 %v1285
      %v1393 = vunpack.c.h.b16 %v1285
      %v1394 = vunpack.c.l.b16 %v1286
      %v1395 = vunpack.c.l.b16 %v1287
      %v1396 = vunpack.c.h.b16 %v1287
      %v1397 = vunpack.c.l.b16 %v1288
      %v1398 = vunpack.c.h.b16 %v1288
      %v1399 = vunpack.c.l.b16 %v1289
      %v1400 = vunpack.c.l.b16 %v1290
      %v1401 = vunpack.c.h.b16 %v1290
      %v1402 = vunpack.c.l.b16 %v1291
      %v1403 = vunpack.c.h.b16 %v1291
      %v1404 = vunpack.c.l.b16 %v1292
      %v1405 = vunpack.c.l.b16 %v1293
      %v1406 = vunpack.c.h.b16 %v1293
      %v1407 = vunpack.c.l.b16 %v1294
      %v1408 = vunpack.c.h.b16 %v1294
      %v1409 = vunpack.c.l.b16 %v1295
      %v1410 = vunpack.c.l.b16 %v1296
      %v1411 = vunpack.c.h.b16 %v1296
      %v1412 = vunpack.c.l.b16 %v1297
      %v1413 = vunpack.c.h.b16 %v1297
      %v1414 = vunpack.c.l.b16 %v1298
      %v1415 = vunpack.c.l.b16 %v1299
      %v1416 = vunpack.c.h.b16 %v1299
      %v1417 = vunpack.c.l.b16 %v1300
      %v1418 = vunpack.c.h.b16 %v1300
      %v1419 = vunpack.c.l.b16 %v1301
      %v1420 = vunpack.c.l.b16 %v1302
      %v1421 = vunpack.c.h.b16 %v1302
      %v1422 = vunpack.c.l.b16 %v1303
      %v1423 = vunpack.c.h.b16 %v1303
      %v1424 = vunpack.c.l.b16 %v1304
      %v1425 = vunpack.c.l.b16 %v1305
      %v1426 = vunpack.c.h.b16 %v1305
      %v1427 = vunpack.c.l.b16 %v1306
      %v1428 = vunpack.c.h.b16 %v1306
      %v1429 = vunpack.c.l.b16 %v1307
      %v1430 = vunpack.c.l.b16 %v1308
      %v1431 = vunpack.c.h.b16 %v1308
      %v1432 = vunpack.c.l.b16 %v1309
      %v1433 = vunpack.c.h.b16 %v1309
      %v1434 = vunpack.c.l.b16 %v1310
      %v1435 = vunpack.c.l.b16 %v1311
      %v1436 = vunpack.c.h.b16 %v1311
      %v1437 = vunpack.c.l.b16 %v1312
      %v1438 = vunpack.c.h.b16 %v1312
      %v1439 = vunpack.c.l.b16 %v1313
      %v1440 = vunpack.c.l.b16 %v1314
      %v1441 = vunpack.c.h.b16 %v1314
      %v1442 = vunpack.c.l.b16 %v1315
      %v1443 = vunpack.c.h.b16 %v1315
      %v1444 = vunpack.c.l.b16 %v1316
      %v1445 = vunpack.c.l.b16 %v1317
      %v1446 = vunpack.c.h.b16 %v1317
      %v1447 = vunpack.c.l.b16 %v1318
      %v1448 = vunpack.c.h.b16 %v1318
      %v1449 = vunpack.c.l.b16 %v1319
      %v1450 = vunpack.c.l.b16 %v1320
      %v1451 = vunpack.c.h.b16 %v1320
      %v1452 = vunpack.c.l.b16 %v1321
      %v1453 = vunpack.c.h.b16 %v1321
      %v1454 = vunpack.c.l.b16 %v1322
      %v1455 = vunpack.c.l.b16 %v1323
      %v1456 = vunpack.c.h.b16 %v1323
      %v1457 = vunpack.c.l.b16 %v1324
      %v1458 = vunpack.c.h.b16 %v1324
      %v1459 = vunpack.c.l.b16 %v1325
      %v1460 = vpack.c.b16 %v1385, %v1380
      %v1461 = vpack.c.b16 %v1386, %v1381
      %v1462 = vpack.c.b16 %v1387, %v1382
      %v1463 = vpack.c.b16 %v1388, %v1383
      %v1464 = vpack.c.b16 %v1389, %v1384
      %v1465 = vpack.c.b16 %v1395, %v1390
      %v1466 = vpack.c.b16 %v1396, %v1391
      %v1467 = vpack.c.b16 %v1397, %v1392
      %v1468 = vpack.c.b16 %v1398, %v1393
      %v1469 = vpack.c.b16 %v1399, %v1394
      %v1470 = vpack.c.b16 %v1405, %v1400
      %v1471 = vpack.c.b16 %v1406, %v1401
      %v1472 = vpack.c.b16 %v1407, %v1402
      %v1473 = vpack.c.b16 %v1408, %v1403
      %v1474 = vpack.c.b16 %v1409, %v1404
      %v1475 = vpack.c.b16 %v1415, %v1410
      %v1476 = vpack.c.b16 %v1416, %v1411
      %v1477 = vpack.c.b16 %v1417, %v1412
      %v1478 = vpack.c.b16 %v1418, %v1413
      %v1479 = vpack.c.b16 %v1419, %v1414
      %v1480 = vpack.c.b16 %v1425, %v1420
      %v1481 = vpack.c.b16 %v1426, %v1421
      %v1482 = vpack.c.b16 %v1427, %v1422
      %v1483 = vpack.c.b16 %v1428, %v1423
      %v1484 = vpack.c.b16 %v1429, %v1424
      %v1485 = vpack.c.b16 %v1435, %v1430
      %v1486 = vpack.c.b16 %v1436, %v1431
      %v1487 = vpack.c.b16 %v1437, %v1432
      %v1488 = vpack.c.b16 %v1438, %v1433
      %v1489 = vpack.c.b16 %v1439, %v1434
      %v1490 = vpack.c.b16 %v1445, %v1440
      %v1491 = vpack.c.b16 %v1446, %v1441
      %v1492 = vpack.c.b16 %v1447, %v1442
      %v1493 = vpack.c.b16 %v1448, %v1443
      %v1494 = vpack.c.b16 %v1449, %v1444
      %v1495 = vpack.c.b16 %v1455, %v1450
      %v1496 = vpack.c.b16 %v1456, %v1451
      %v1497 = vpack.c.b16 %v1457, %v1452
      %v1498 = vpack.c.b16 %v1458, %v1453
      %v1499 = vpack.c.b16 %v1459, %v1454
      %1540 = vmatprep.subr.bf16.mxu0 %v1496
      %1541 = vmatpush1.bf16.msra.mxu0 %v1495
      %1542 = vmatprep.subr.bf16.mxu0 %v1491
      %1543 = vmatpush1.bf16.msra.mxu0 %v1490
      %1544 = vmatprep.subr.bf16.mxu0 %v1486
      %1545 = vmatpush1.bf16.msra.mxu0 %v1485
      %1546 = vmatprep.subr.bf16.mxu0 %v1481
      %1547 = vmatpush1.bf16.msra.mxu0 %v1480
      %1548 = vmatprep.subr.bf16.mxu0 %v1476
      %1549 = vmatpush1.bf16.msra.mxu0 %v1475
      %1550 = vmatprep.subr.bf16.mxu0 %v1471
      %1551 = vmatpush1.bf16.msra.mxu0 %v1470
      %1552 = vmatprep.subr.bf16.mxu0 %v1466
      %1553 = vmatpush1.bf16.msra.mxu0 %v1465
      %1554 = vmatprep.subr.bf16.mxu0 %v1461
      %1555 = vmatpush1.bf16.msra.mxu0 %v1460
      %1556 = vmatprep.subr.bf16.mxu0 0
      %1557 = vmatpush2.bf16.msra.mxu0 0
      %1558 = vmatprep.subr.bf16.mxu0 0
      %1559 = vmatpush2.bf16.msra.mxu0 0
      %1560 = vmatprep.subr.bf16.mxu0 0
      %1561 = vmatpush2.bf16.msra.mxu0 0
      %1562 = vmatprep.subr.bf16.mxu0 0
      %1563 = vmatpush2.bf16.msra.mxu0 0
      %1564 = vmatprep.subr.bf16.mxu0 0
      %1565 = vmatpush2.bf16.msra.mxu0 0
      %1566 = vmatprep.subr.bf16.mxu0 0
      %1567 = vmatpush2.bf16.msra.mxu0 0
      %1568 = vmatprep.subr.bf16.mxu0 0
      %1569 = vmatpush2.bf16.msra.mxu0 0
      %1570 = vmatprep.subr.bf16.mxu0 0
      %1571 = vmatpush2.bf16.msra.mxu0 0
      %1572 = vmatprep.mubr.bf16.mxu0 0
      %1573 = vmatmul.mubr.bf16.gmra.mxu0 %v1328
      %v1574 = vpop.f32.mrf.mxu0
      %v1575 = vadd.f32 0.0, %v1574
      %v1576 = vpop.f32.mrf.mxu0
      %v1577 = vadd.f32 0.0, %v1576
      %v1578 = vpop.f32.mrf.mxu0
      %v1579 = vadd.f32 0.0, %v1578
      %v1580 = vpop.f32.mrf.mxu0
      %v1581 = vadd.f32 0.0, %v1580
      %1582 = vdwg.mxu0
      %1583 = vmatprep.subr.bf16.mxu0 %v1498
      %1584 = vmatpush1.bf16.msra.mxu0 %v1497
      %1585 = vmatprep.subr.bf16.mxu0 %v1493
      %1586 = vmatpush1.bf16.msra.mxu0 %v1492
      %1587 = vmatprep.subr.bf16.mxu0 %v1488
      %1588 = vmatpush1.bf16.msra.mxu0 %v1487
      %1589 = vmatprep.subr.bf16.mxu0 %v1483
      %1590 = vmatpush1.bf16.msra.mxu0 %v1482
      %1591 = vmatprep.subr.bf16.mxu0 %v1478
      %1592 = vmatpush1.bf16.msra.mxu0 %v1477
      %1593 = vmatprep.subr.bf16.mxu0 %v1473
      %1594 = vmatpush1.bf16.msra.mxu0 %v1472
      %1595 = vmatprep.subr.bf16.mxu0 %v1468
      %1596 = vmatpush1.bf16.msra.mxu0 %v1467
      %1597 = vmatprep.subr.bf16.mxu0 %v1463
      %1598 = vmatpush1.bf16.msra.mxu0 %v1462
      %1599 = vmatprep.subr.bf16.mxu0 0
      %1600 = vmatpush2.bf16.msra.mxu0 0
      %1601 = vmatprep.subr.bf16.mxu0 0
      %1602 = vmatpush2.bf16.msra.mxu0 0
      %1603 = vmatprep.subr.bf16.mxu0 0
      %1604 = vmatpush2.bf16.msra.mxu0 0
      %1605 = vmatprep.subr.bf16.mxu0 0
      %1606 = vmatpush2.bf16.msra.mxu0 0
      %1607 = vmatprep.subr.bf16.mxu0 0
      %1608 = vmatpush2.bf16.msra.mxu0 0
      %1609 = vmatprep.subr.bf16.mxu0 0
      %1610 = vmatpush2.bf16.msra.mxu0 0
      %1611 = vmatprep.subr.bf16.mxu0 0
      %1612 = vmatpush2.bf16.msra.mxu0 0
      %1613 = vmatprep.subr.bf16.mxu0 0
      %1614 = vmatpush2.bf16.msra.mxu0 0
      %1615 = vmatprep.mubr.bf16.mxu0 0
      %1616 = vmatmul.mubr.bf16.gmra.mxu0 %v1328
      %v1617 = vpop.f32.mrf.mxu0
      %v1618 = vadd.f32 0.0, %v1617
      %v1619 = vpop.f32.mrf.mxu0
      %v1620 = vadd.f32 0.0, %v1619
      %v1621 = vpop.f32.mrf.mxu0
      %v1622 = vadd.f32 0.0, %v1621
      %v1623 = vpop.f32.mrf.mxu0
      %v1624 = vadd.f32 0.0, %v1623
      %1625 = vdwg.mxu0
      %1626 = vmatprep.subr.bf16.mxu0 0
      %1627 = vmatpush1.bf16.msra.mxu0 %v1499
      %1628 = vmatprep.subr.bf16.mxu0 0
      %1629 = vmatpush1.bf16.msra.mxu0 %v1494
      %1630 = vmatprep.subr.bf16.mxu0 0
      %1631 = vmatpush1.bf16.msra.mxu0 %v1489
      %1632 = vmatprep.subr.bf16.mxu0 0
      %1633 = vmatpush1.bf16.msra.mxu0 %v1484
      %1634 = vmatprep.subr.bf16.mxu0 0
      %1635 = vmatpush1.bf16.msra.mxu0 %v1479
      %1636 = vmatprep.subr.bf16.mxu0 0
      %1637 = vmatpush1.bf16.msra.mxu0 %v1474
      %1638 = vmatprep.subr.bf16.mxu0 0
      %1639 = vmatpush1.bf16.msra.mxu0 %v1469
      %1640 = vmatprep.subr.bf16.mxu0 0
      %1641 = vmatpush1.bf16.msra.mxu0 %v1464
      %1642 = vmatprep.subr.bf16.mxu0 0
      %1643 = vmatpush2.bf16.msra.mxu0 0
      %1644 = vmatprep.subr.bf16.mxu0 0
      %1645 = vmatpush2.bf16.msra.mxu0 0
      %1646 = vmatprep.subr.bf16.mxu0 0
      %1647 = vmatpush2.bf16.msra.mxu0 0
      %1648 = vmatprep.subr.bf16.mxu0 0
      %1649 = vmatpush2.bf16.msra.mxu0 0
      %1650 = vmatprep.subr.bf16.mxu0 0
      %1651 = vmatpush2.bf16.msra.mxu0 0
      %1652 = vmatprep.subr.bf16.mxu0 0
      %1653 = vmatpush2.bf16.msra.mxu0 0
      %1654 = vmatprep.subr.bf16.mxu0 0
      %1655 = vmatpush2.bf16.msra.mxu0 0
      %1656 = vmatprep.subr.bf16.mxu0 0
      %1657 = vmatpush2.bf16.msra.mxu0 0
      %1658 = vmatprep.mubr.bf16.mxu0 0
      %1659 = vmatmul.mubr.bf16.gmra.mxu0 %v1328
      %v1660 = vpop.f32.mrf.mxu0
      %v1661 = vadd.f32 0.0, %v1660
      %v1662 = vpop.f32.mrf.mxu0
      %v1663 = vpop.f32.mrf.mxu0
      %v1664 = vadd.f32 0.0, %v1663
      %v1665 = vpop.f32.mrf.mxu0
      %1666 = vdwg.mxu0
      %v1667 = vadd.f32 %v932, %v1575
      %v1668 = vadd.f32 %v934, %v1577
      %v1669 = vadd.f32 %v975, %v1618
      %v1670 = vadd.f32 %v977, %v1620
      %v1671 = vadd.f32 %v1018, %v1661
      %v1672 = vadd.f32 %v936, %v1579
      %v1673 = vadd.f32 %v938, %v1581
      %v1674 = vadd.f32 %v979, %v1622
      %v1675 = vadd.f32 %v981, %v1624
      %v1676 = vadd.f32 %v1021, %v1664
      %1677 = vmatprep.subr.bf16.mxu0 %v1496
      %1678 = vmatpush1.bf16.msra.mxu0 %v1495
      %1679 = vmatprep.subr.bf16.mxu0 %v1491
      %1680 = vmatpush1.bf16.msra.mxu0 %v1490
      %1681 = vmatprep.subr.bf16.mxu0 %v1486
      %1682 = vmatpush1.bf16.msra.mxu0 %v1485
      %1683 = vmatprep.subr.bf16.mxu0 %v1481
      %1684 = vmatpush1.bf16.msra.mxu0 %v1480
      %1685 = vmatprep.subr.bf16.mxu0 %v1476
      %1686 = vmatpush1.bf16.msra.mxu0 %v1475
      %1687 = vmatprep.subr.bf16.mxu0 %v1471
      %1688 = vmatpush1.bf16.msra.mxu0 %v1470
      %1689 = vmatprep.subr.bf16.mxu0 %v1466
      %1690 = vmatpush1.bf16.msra.mxu0 %v1465
      %1691 = vmatprep.subr.bf16.mxu0 %v1461
      %1692 = vmatpush1.bf16.msra.mxu0 %v1460
      %1693 = vmatprep.subr.bf16.mxu0 0
      %1694 = vmatpush2.bf16.msra.mxu0 0
      %1695 = vmatprep.subr.bf16.mxu0 0
      %1696 = vmatpush2.bf16.msra.mxu0 0
      %1697 = vmatprep.subr.bf16.mxu0 0
      %1698 = vmatpush2.bf16.msra.mxu0 0
      %1699 = vmatprep.subr.bf16.mxu0 0
      %1700 = vmatpush2.bf16.msra.mxu0 0
      %1701 = vmatprep.subr.bf16.mxu0 0
      %1702 = vmatpush2.bf16.msra.mxu0 0
      %1703 = vmatprep.subr.bf16.mxu0 0
      %1704 = vmatpush2.bf16.msra.mxu0 0
      %1705 = vmatprep.subr.bf16.mxu0 0
      %1706 = vmatpush2.bf16.msra.mxu0 0
      %1707 = vmatprep.subr.bf16.mxu0 0
      %1708 = vmatpush2.bf16.msra.mxu0 0
      %1709 = vmatprep.mubr.bf16.mxu0 0
      %1710 = vmatmul.mubr.bf16.gmra.mxu0 %v1331
      %v1711 = vpop.f32.mrf.mxu0
      %v1712 = vadd.f32 0.0, %v1711
      %v1713 = vpop.f32.mrf.mxu0
      %v1714 = vadd.f32 0.0, %v1713
      %v1715 = vpop.f32.mrf.mxu0
      %v1716 = vadd.f32 0.0, %v1715
      %v1717 = vpop.f32.mrf.mxu0
      %v1718 = vadd.f32 0.0, %v1717
      %1719 = vdwg.mxu0
      %1720 = vmatprep.subr.bf16.mxu0 %v1498
      %1721 = vmatpush1.bf16.msra.mxu0 %v1497
      %1722 = vmatprep.subr.bf16.mxu0 %v1493
      %1723 = vmatpush1.bf16.msra.mxu0 %v1492
      %1724 = vmatprep.subr.bf16.mxu0 %v1488
      %1725 = vmatpush1.bf16.msra.mxu0 %v1487
      %1726 = vmatprep.subr.bf16.mxu0 %v1483
      %1727 = vmatpush1.bf16.msra.mxu0 %v1482
      %1728 = vmatprep.subr.bf16.mxu0 %v1478
      %1729 = vmatpush1.bf16.msra.mxu0 %v1477
      %1730 = vmatprep.subr.bf16.mxu0 %v1473
      %1731 = vmatpush1.bf16.msra.mxu0 %v1472
      %1732 = vmatprep.subr.bf16.mxu0 %v1468
      %1733 = vmatpush1.bf16.msra.mxu0 %v1467
      %1734 = vmatprep.subr.bf16.mxu0 %v1463
      %1735 = vmatpush1.bf16.msra.mxu0 %v1462
      %1736 = vmatprep.subr.bf16.mxu0 0
      %1737 = vmatpush2.bf16.msra.mxu0 0
      %1738 = vmatprep.subr.bf16.mxu0 0
      %1739 = vmatpush2.bf16.msra.mxu0 0
      %1740 = vmatprep.subr.bf16.mxu0 0
      %1741 = vmatpush2.bf16.msra.mxu0 0
      %1742 = vmatprep.subr.bf16.mxu0 0
      %1743 = vmatpush2.bf16.msra.mxu0 0
      %1744 = vmatprep.subr.bf16.mxu0 0
      %1745 = vmatpush2.bf16.msra.mxu0 0
      %1746 = vmatprep.subr.bf16.mxu0 0
      %1747 = vmatpush2.bf16.msra.mxu0 0
      %1748 = vmatprep.subr.bf16.mxu0 0
      %1749 = vmatpush2.bf16.msra.mxu0 0
      %1750 = vmatprep.subr.bf16.mxu0 0
      %1751 = vmatpush2.bf16.msra.mxu0 0
      %1752 = vmatprep.mubr.bf16.mxu0 0
      %1753 = vmatmul.mubr.bf16.gmra.mxu0 %v1331
      %v1754 = vpop.f32.mrf.mxu0
      %v1755 = vadd.f32 0.0, %v1754
      %v1756 = vpop.f32.mrf.mxu0
      %v1757 = vadd.f32 0.0, %v1756
      %v1758 = vpop.f32.mrf.mxu0
      %v1759 = vadd.f32 0.0, %v1758
      %v1760 = vpop.f32.mrf.mxu0
      %v1761 = vadd.f32 0.0, %v1760
      %1762 = vdwg.mxu0
      %1763 = vmatprep.subr.bf16.mxu0 0
      %1764 = vmatpush1.bf16.msra.mxu0 %v1499
      %1765 = vmatprep.subr.bf16.mxu0 0
      %1766 = vmatpush1.bf16.msra.mxu0 %v1494
      %1767 = vmatprep.subr.bf16.mxu0 0
      %1768 = vmatpush1.bf16.msra.mxu0 %v1489
      %1769 = vmatprep.subr.bf16.mxu0 0
      %1770 = vmatpush1.bf16.msra.mxu0 %v1484
      %1771 = vmatprep.subr.bf16.mxu0 0
      %1772 = vmatpush1.bf16.msra.mxu0 %v1479
      %1773 = vmatprep.subr.bf16.mxu0 0
      %1774 = vmatpush1.bf16.msra.mxu0 %v1474
      %1775 = vmatprep.subr.bf16.mxu0 0
      %1776 = vmatpush1.bf16.msra.mxu0 %v1469
      %1777 = vmatprep.subr.bf16.mxu0 0
      %1778 = vmatpush1.bf16.msra.mxu0 %v1464
      %1779 = vmatprep.subr.bf16.mxu0 0
      %1780 = vmatpush2.bf16.msra.mxu0 0
      %1781 = vmatprep.subr.bf16.mxu0 0
      %1782 = vmatpush2.bf16.msra.mxu0 0
      %1783 = vmatprep.subr.bf16.mxu0 0
      %1784 = vmatpush2.bf16.msra.mxu0 0
      %1785 = vmatprep.subr.bf16.mxu0 0
      %1786 = vmatpush2.bf16.msra.mxu0 0
      %1787 = vmatprep.subr.bf16.mxu0 0
      %1788 = vmatpush2.bf16.msra.mxu0 0
      %1789 = vmatprep.subr.bf16.mxu0 0
      %1790 = vmatpush2.bf16.msra.mxu0 0
      %1791 = vmatprep.subr.bf16.mxu0 0
      %1792 = vmatpush2.bf16.msra.mxu0 0
      %1793 = vmatprep.subr.bf16.mxu0 0
      %1794 = vmatpush2.bf16.msra.mxu0 0
      %1795 = vmatprep.mubr.bf16.mxu0 0
      %1796 = vmatmul.mubr.bf16.gmra.mxu0 %v1331
      %v1797 = vpop.f32.mrf.mxu0
      %v1798 = vadd.f32 0.0, %v1797
      %v1799 = vpop.f32.mrf.mxu0
      %v1800 = vpop.f32.mrf.mxu0
      %v1801 = vadd.f32 0.0, %v1800
      %v1802 = vpop.f32.mrf.mxu0
      %1803 = vdwg.mxu0
      %v1804 = vadd.f32 %v1186, %v1712
      %v1805 = vadd.f32 %v1188, %v1714
      %v1806 = vadd.f32 %v1229, %v1755
      %v1807 = vadd.f32 %v1231, %v1757
      %v1808 = vadd.f32 %v1272, %v1798
      %v1809 = vadd.f32 %v1190, %v1716
      %v1810 = vadd.f32 %v1192, %v1718
      %v1811 = vadd.f32 %v1233, %v1759
      %v1812 = vadd.f32 %v1235, %v1761
      %v1813 = vadd.f32 %v1275, %v1801
      %v1814 = vld [vmem:[%s2 + $0x3c0] sm:$0xff]
      %v1815 = vld [vmem:[%s2 + $0x3c8] sm:$0xff]
      %v1816 = vld [vmem:[%s2 + $0x3d0] sm:$0xf]
      %v1817 = vld [vmem:[%s2 + $0x3d4] sm:$0xff]
      %v1818 = vld [vmem:[%s2 + $0x3dc] sm:$0xff]
      %v1819 = vld [vmem:[%s2 + $0x3e4] sm:$0xf]
      %v1820 = vld [vmem:[%s2 + $0x3e8] sm:$0xff]
      %v1821 = vld [vmem:[%s2 + $0x3f0] sm:$0xff]
      %v1822 = vld [vmem:[%s2 + $0x3f8] sm:$0xf]
      %v1823 = vld [vmem:[%s2 + $0x3fc] sm:$0xff]
      %v1824 = vld [vmem:[%s2 + $0x404] sm:$0xff]
      %v1825 = vld [vmem:[%s2 + $0x40c] sm:$0xf]
      %v1826 = vld [vmem:[%s2 + $0x410] sm:$0xff]
      %v1827 = vld [vmem:[%s2 + $0x418] sm:$0xff]
      %v1828 = vld [vmem:[%s2 + $0x420] sm:$0xf]
      %v1829 = vld [vmem:[%s2 + $0x424] sm:$0xff]
      %v1830 = vld [vmem:[%s2 + $0x42c] sm:$0xff]
      %v1831 = vld [vmem:[%s2 + $0x434] sm:$0xf]
      %v1832 = vld [vmem:[%s2 + $0x438] sm:$0xff]
      %v1833 = vld [vmem:[%s2 + $0x440] sm:$0xff]
      %v1834 = vld [vmem:[%s2 + $0x448] sm:$0xf]
      %v1835 = vld [vmem:[%s2 + $0x44c] sm:$0xff]
      %v1836 = vld [vmem:[%s2 + $0x454] sm:$0xff]
      %v1837 = vld [vmem:[%s2 + $0x45c] sm:$0xf]
      %v1838 = vld [vmem:[%s2 + $0x460] sm:$0xff]
      %v1839 = vld [vmem:[%s2 + $0x468] sm:$0xff]
      %v1840 = vld [vmem:[%s2 + $0x470] sm:$0xf]
      %v1841 = vld [vmem:[%s2 + $0x474] sm:$0xff]
      %v1842 = vld [vmem:[%s2 + $0x47c] sm:$0xff]
      %v1843 = vld [vmem:[%s2 + $0x484] sm:$0xf]
      %v1844 = vld [vmem:[%s2 + $0x488] sm:$0xff]
      %v1845 = vld [vmem:[%s2 + $0x490] sm:$0xff]
      %v1846 = vld [vmem:[%s2 + $0x498] sm:$0xf]
      %v1847 = vld [vmem:[%s2 + $0x49c] sm:$0xff]
      %v1848 = vld [vmem:[%s2 + $0x4a4] sm:$0xff]
      %v1849 = vld [vmem:[%s2 + $0x4ac] sm:$0xf]
      %v1850 = vld [vmem:[%s2 + $0x4b0] sm:$0xff]
      %v1851 = vld [vmem:[%s2 + $0x4b8] sm:$0xff]
      %v1852 = vld [vmem:[%s2 + $0x4c0] sm:$0xf]
      %v1853 = vld [vmem:[%s2 + $0x4c4] sm:$0xff]
      %v1854 = vld [vmem:[%s2 + $0x4cc] sm:$0xff]
      %v1855 = vld [vmem:[%s2 + $0x4d4] sm:$0xf]
      %v1856 = vld [vmem:[%s2 + $0x4d8] sm:$0xff]
      %v1857 = vld [vmem:[%s2 + $0x4e0] sm:$0xff]
      %v1858 = vld [vmem:[%s2 + $0x4e8] sm:$0xf]
      %v1859 = vld [vmem:[%s2 + $0x4ec] sm:$0xff]
      %v1860 = vld [vmem:[%s2 + $0x4f4] sm:$0xff]
      %v1861 = vld [vmem:[%s2 + $0x4fc] sm:$0xf]
      %v1862 = vld [vmem:[%s214 + $0x3] sm:$0xff]
      %v1863 = vld [vmem:[%s214 + $0xb] sm:$0xff]
      %v1864 = vpack.c.bf16 %v1863, %v1862
      %v1865 = vld [vmem:[%s223 + $0x3] sm:$0xff]
      %v1866 = vld [vmem:[%s223 + $0xb] sm:$0xff]
      %v1867 = vpack.c.bf16 %v1866, %v1865
      %v1916 = vunpack.c.l.b16 %v1814
      %v1917 = vunpack.c.h.b16 %v1814
      %v1918 = vunpack.c.l.b16 %v1815
      %v1919 = vunpack.c.h.b16 %v1815
      %v1920 = vunpack.c.l.b16 %v1816
      %v1921 = vunpack.c.l.b16 %v1817
      %v1922 = vunpack.c.h.b16 %v1817
      %v1923 = vunpack.c.l.b16 %v1818
      %v1924 = vunpack.c.h.b16 %v1818
      %v1925 = vunpack.c.l.b16 %v1819
      %v1926 = vunpack.c.l.b16 %v1820
      %v1927 = vunpack.c.h.b16 %v1820
      %v1928 = vunpack.c.l.b16 %v1821
      %v1929 = vunpack.c.h.b16 %v1821
      %v1930 = vunpack.c.l.b16 %v1822
      %v1931 = vunpack.c.l.b16 %v1823
      %v1932 = vunpack.c.h.b16 %v1823
      %v1933 = vunpack.c.l.b16 %v1824
      %v1934 = vunpack.c.h.b16 %v1824
      %v1935 = vunpack.c.l.b16 %v1825
      %v1936 = vunpack.c.l.b16 %v1826
      %v1937 = vunpack.c.h.b16 %v1826
      %v1938 = vunpack.c.l.b16 %v1827
      %v1939 = vunpack.c.h.b16 %v1827
      %v1940 = vunpack.c.l.b16 %v1828
      %v1941 = vunpack.c.l.b16 %v1829
      %v1942 = vunpack.c.h.b16 %v1829
      %v1943 = vunpack.c.l.b16 %v1830
      %v1944 = vunpack.c.h.b16 %v1830
      %v1945 = vunpack.c.l.b16 %v1831
      %v1946 = vunpack.c.l.b16 %v1832
      %v1947 = vunpack.c.h.b16 %v1832
      %v1948 = vunpack.c.l.b16 %v1833
      %v1949 = vunpack.c.h.b16 %v1833
      %v1950 = vunpack.c.l.b16 %v1834
      %v1951 = vunpack.c.l.b16 %v1835
      %v1952 = vunpack.c.h.b16 %v1835
      %v1953 = vunpack.c.l.b16 %v1836
      %v1954 = vunpack.c.h.b16 %v1836
      %v1955 = vunpack.c.l.b16 %v1837
      %v1956 = vunpack.c.l.b16 %v1838
      %v1957 = vunpack.c.h.b16 %v1838
      %v1958 = vunpack.c.l.b16 %v1839
      %v1959 = vunpack.c.h.b16 %v1839
      %v1960 = vunpack.c.l.b16 %v1840
      %v1961 = vunpack.c.l.b16 %v1841
      %v1962 = vunpack.c.h.b16 %v1841
      %v1963 = vunpack.c.l.b16 %v1842
      %v1964 = vunpack.c.h.b16 %v1842
      %v1965 = vunpack.c.l.b16 %v1843
      %v1966 = vunpack.c.l.b16 %v1844
      %v1967 = vunpack.c.h.b16 %v1844
      %v1968 = vunpack.c.l.b16 %v1845
      %v1969 = vunpack.c.h.b16 %v1845
      %v1970 = vunpack.c.l.b16 %v1846
      %v1971 = vunpack.c.l.b16 %v1847
      %v1972 = vunpack.c.h.b16 %v1847
      %v1973 = vunpack.c.l.b16 %v1848
      %v1974 = vunpack.c.h.b16 %v1848
      %v1975 = vunpack.c.l.b16 %v1849
      %v1976 = vunpack.c.l.b16 %v1850
      %v1977 = vunpack.c.h.b16 %v1850
      %v1978 = vunpack.c.l.b16 %v1851
      %v1979 = vunpack.c.h.b16 %v1851
      %v1980 = vunpack.c.l.b16 %v1852
      %v1981 = vunpack.c.l.b16 %v1853
      %v1982 = vunpack.c.h.b16 %v1853
      %v1983 = vunpack.c.l.b16 %v1854
      %v1984 = vunpack.c.h.b16 %v1854
      %v1985 = vunpack.c.l.b16 %v1855
      %v1986 = vunpack.c.l.b16 %v1856
      %v1987 = vunpack.c.h.b16 %v1856
      %v1988 = vunpack.c.l.b16 %v1857
      %v1989 = vunpack.c.h.b16 %v1857
      %v1990 = vunpack.c.l.b16 %v1858
      %v1991 = vunpack.c.l.b16 %v1859
      %v1992 = vunpack.c.h.b16 %v1859
      %v1993 = vunpack.c.l.b16 %v1860
      %v1994 = vunpack.c.h.b16 %v1860
      %v1995 = vunpack.c.l.b16 %v1861
      %v1996 = vpack.c.b16 %v1921, %v1916
      %v1997 = vpack.c.b16 %v1922, %v1917
      %v1998 = vpack.c.b16 %v1923, %v1918
      %v1999 = vpack.c.b16 %v1924, %v1919
      %v2000 = vpack.c.b16 %v1925, %v1920
      %v2001 = vpack.c.b16 %v1931, %v1926
      %v2002 = vpack.c.b16 %v1932, %v1927
      %v2003 = vpack.c.b16 %v1933, %v1928
      %v2004 = vpack.c.b16 %v1934, %v1929
      %v2005 = vpack.c.b16 %v1935, %v1930
      %v2006 = vpack.c.b16 %v1941, %v1936
      %v2007 = vpack.c.b16 %v1942, %v1937
      %v2008 = vpack.c.b16 %v1943, %v1938
      %v2009 = vpack.c.b16 %v1944, %v1939
      %v2010 = vpack.c.b16 %v1945, %v1940
      %v2011 = vpack.c.b16 %v1951, %v1946
      %v2012 = vpack.c.b16 %v1952, %v1947
      %v2013 = vpack.c.b16 %v1953, %v1948
      %v2014 = vpack.c.b16 %v1954, %v1949
      %v2015 = vpack.c.b16 %v1955, %v1950
      %v2016 = vpack.c.b16 %v1961, %v1956
      %v2017 = vpack.c.b16 %v1962, %v1957
      %v2018 = vpack.c.b16 %v1963, %v1958
      %v2019 = vpack.c.b16 %v1964, %v1959
      %v2020 = vpack.c.b16 %v1965, %v1960
      %v2021 = vpack.c.b16 %v1971, %v1966
      %v2022 = vpack.c.b16 %v1972, %v1967
      %v2023 = vpack.c.b16 %v1973, %v1968
      %v2024 = vpack.c.b16 %v1974, %v1969
      %v2025 = vpack.c.b16 %v1975, %v1970
      %v2026 = vpack.c.b16 %v1981, %v1976
      %v2027 = vpack.c.b16 %v1982, %v1977
      %v2028 = vpack.c.b16 %v1983, %v1978
      %v2029 = vpack.c.b16 %v1984, %v1979
      %v2030 = vpack.c.b16 %v1985, %v1980
      %v2031 = vpack.c.b16 %v1991, %v1986
      %v2032 = vpack.c.b16 %v1992, %v1987
      %v2033 = vpack.c.b16 %v1993, %v1988
      %v2034 = vpack.c.b16 %v1994, %v1989
      %v2035 = vpack.c.b16 %v1995, %v1990
      %2076 = vmatprep.subr.bf16.mxu0 %v2032
      %2077 = vmatpush1.bf16.msra.mxu0 %v2031
      %2078 = vmatprep.subr.bf16.mxu0 %v2027
      %2079 = vmatpush1.bf16.msra.mxu0 %v2026
      %2080 = vmatprep.subr.bf16.mxu0 %v2022
      %2081 = vmatpush1.bf16.msra.mxu0 %v2021
      %2082 = vmatprep.subr.bf16.mxu0 %v2017
      %2083 = vmatpush1.bf16.msra.mxu0 %v2016
      %2084 = vmatprep.subr.bf16.mxu0 %v2012
      %2085 = vmatpush1.bf16.msra.mxu0 %v2011
      %2086 = vmatprep.subr.bf16.mxu0 %v2007
      %2087 = vmatpush1.bf16.msra.mxu0 %v2006
      %2088 = vmatprep.subr.bf16.mxu0 %v2002
      %2089 = vmatpush1.bf16.msra.mxu0 %v2001
      %2090 = vmatprep.subr.bf16.mxu0 %v1997
      %2091 = vmatpush1.bf16.msra.mxu0 %v1996
      %2092 = vmatprep.subr.bf16.mxu0 0
      %2093 = vmatpush2.bf16.msra.mxu0 0
      %2094 = vmatprep.subr.bf16.mxu0 0
      %2095 = vmatpush2.bf16.msra.mxu0 0
      %2096 = vmatprep.subr.bf16.mxu0 0
      %2097 = vmatpush2.bf16.msra.mxu0 0
      %2098 = vmatprep.subr.bf16.mxu0 0
      %2099 = vmatpush2.bf16.msra.mxu0 0
      %2100 = vmatprep.subr.bf16.mxu0 0
      %2101 = vmatpush2.bf16.msra.mxu0 0
      %2102 = vmatprep.subr.bf16.mxu0 0
      %2103 = vmatpush2.bf16.msra.mxu0 0
      %2104 = vmatprep.subr.bf16.mxu0 0
      %2105 = vmatpush2.bf16.msra.mxu0 0
      %2106 = vmatprep.subr.bf16.mxu0 0
      %2107 = vmatpush2.bf16.msra.mxu0 0
      %2108 = vmatprep.mubr.bf16.mxu0 0
      %2109 = vmatmul.mubr.bf16.gmra.mxu0 %v1864
      %v2110 = vpop.f32.mrf.mxu0
      %v2111 = vadd.f32 0.0, %v2110
      %v2112 = vpop.f32.mrf.mxu0
      %v2113 = vadd.f32 0.0, %v2112
      %v2114 = vpop.f32.mrf.mxu0
      %v2115 = vadd.f32 0.0, %v2114
      %v2116 = vpop.f32.mrf.mxu0
      %v2117 = vadd.f32 0.0, %v2116
      %2118 = vdwg.mxu0
      %2119 = vmatprep.subr.bf16.mxu0 %v2034
      %2120 = vmatpush1.bf16.msra.mxu0 %v2033
      %2121 = vmatprep.subr.bf16.mxu0 %v2029
      %2122 = vmatpush1.bf16.msra.mxu0 %v2028
      %2123 = vmatprep.subr.bf16.mxu0 %v2024
      %2124 = vmatpush1.bf16.msra.mxu0 %v2023
      %2125 = vmatprep.subr.bf16.mxu0 %v2019
      %2126 = vmatpush1.bf16.msra.mxu0 %v2018
      %2127 = vmatprep.subr.bf16.mxu0 %v2014
      %2128 = vmatpush1.bf16.msra.mxu0 %v2013
      %2129 = vmatprep.subr.bf16.mxu0 %v2009
      %2130 = vmatpush1.bf16.msra.mxu0 %v2008
      %2131 = vmatprep.subr.bf16.mxu0 %v2004
      %2132 = vmatpush1.bf16.msra.mxu0 %v2003
      %2133 = vmatprep.subr.bf16.mxu0 %v1999
      %2134 = vmatpush1.bf16.msra.mxu0 %v1998
      %2135 = vmatprep.subr.bf16.mxu0 0
      %2136 = vmatpush2.bf16.msra.mxu0 0
      %2137 = vmatprep.subr.bf16.mxu0 0
      %2138 = vmatpush2.bf16.msra.mxu0 0
      %2139 = vmatprep.subr.bf16.mxu0 0
      %2140 = vmatpush2.bf16.msra.mxu0 0
      %2141 = vmatprep.subr.bf16.mxu0 0
      %2142 = vmatpush2.bf16.msra.mxu0 0
      %2143 = vmatprep.subr.bf16.mxu0 0
      %2144 = vmatpush2.bf16.msra.mxu0 0
      %2145 = vmatprep.subr.bf16.mxu0 0
      %2146 = vmatpush2.bf16.msra.mxu0 0
      %2147 = vmatprep.subr.bf16.mxu0 0
      %2148 = vmatpush2.bf16.msra.mxu0 0
      %2149 = vmatprep.subr.bf16.mxu0 0
      %2150 = vmatpush2.bf16.msra.mxu0 0
      %2151 = vmatprep.mubr.bf16.mxu0 0
      %2152 = vmatmul.mubr.bf16.gmra.mxu0 %v1864
      %v2153 = vpop.f32.mrf.mxu0
      %v2154 = vadd.f32 0.0, %v2153
      %v2155 = vpop.f32.mrf.mxu0
      %v2156 = vadd.f32 0.0, %v2155
      %v2157 = vpop.f32.mrf.mxu0
      %v2158 = vadd.f32 0.0, %v2157
      %v2159 = vpop.f32.mrf.mxu0
      %v2160 = vadd.f32 0.0, %v2159
      %2161 = vdwg.mxu0
      %2162 = vmatprep.subr.bf16.mxu0 0
      %2163 = vmatpush1.bf16.msra.mxu0 %v2035
      %2164 = vmatprep.subr.bf16.mxu0 0
      %2165 = vmatpush1.bf16.msra.mxu0 %v2030
      %2166 = vmatprep.subr.bf16.mxu0 0
      %2167 = vmatpush1.bf16.msra.mxu0 %v2025
      %2168 = vmatprep.subr.bf16.mxu0 0
      %2169 = vmatpush1.bf16.msra.mxu0 %v2020
      %2170 = vmatprep.subr.bf16.mxu0 0
      %2171 = vmatpush1.bf16.msra.mxu0 %v2015
      %2172 = vmatprep.subr.bf16.mxu0 0
      %2173 = vmatpush1.bf16.msra.mxu0 %v2010
      %2174 = vmatprep.subr.bf16.mxu0 0
      %2175 = vmatpush1.bf16.msra.mxu0 %v2005
      %2176 = vmatprep.subr.bf16.mxu0 0
      %2177 = vmatpush1.bf16.msra.mxu0 %v2000
      %2178 = vmatprep.subr.bf16.mxu0 0
      %2179 = vmatpush2.bf16.msra.mxu0 0
      %2180 = vmatprep.subr.bf16.mxu0 0
      %2181 = vmatpush2.bf16.msra.mxu0 0
      %2182 = vmatprep.subr.bf16.mxu0 0
      %2183 = vmatpush2.bf16.msra.mxu0 0
      %2184 = vmatprep.subr.bf16.mxu0 0
      %2185 = vmatpush2.bf16.msra.mxu0 0
      %2186 = vmatprep.subr.bf16.mxu0 0
      %2187 = vmatpush2.bf16.msra.mxu0 0
      %2188 = vmatprep.subr.bf16.mxu0 0
      %2189 = vmatpush2.bf16.msra.mxu0 0
      %2190 = vmatprep.subr.bf16.mxu0 0
      %2191 = vmatpush2.bf16.msra.mxu0 0
      %2192 = vmatprep.subr.bf16.mxu0 0
      %2193 = vmatpush2.bf16.msra.mxu0 0
      %2194 = vmatprep.mubr.bf16.mxu0 0
      %2195 = vmatmul.mubr.bf16.gmra.mxu0 %v1864
      %v2196 = vpop.f32.mrf.mxu0
      %v2197 = vadd.f32 0.0, %v2196
      %v2198 = vpop.f32.mrf.mxu0
      %v2199 = vpop.f32.mrf.mxu0
      %v2200 = vadd.f32 0.0, %v2199
      %v2201 = vpop.f32.mrf.mxu0
      %2202 = vdwg.mxu0
      %v2203 = vadd.f32 %v1667, %v2111
      %v2204 = vadd.f32 %v1668, %v2113
      %v2205 = vadd.f32 %v1669, %v2154
      %v2206 = vadd.f32 %v1670, %v2156
      %v2207 = vadd.f32 %v1671, %v2197
      %v2208 = vadd.f32 %v1672, %v2115
      %v2209 = vadd.f32 %v1673, %v2117
      %v2210 = vadd.f32 %v1674, %v2158
      %v2211 = vadd.f32 %v1675, %v2160
      %v2212 = vadd.f32 %v1676, %v2200
      %2213 = vmatprep.subr.bf16.mxu0 %v2032
      %2214 = vmatpush1.bf16.msra.mxu0 %v2031
      %2215 = vmatprep.subr.bf16.mxu0 %v2027
      %2216 = vmatpush1.bf16.msra.mxu0 %v2026
      %2217 = vmatprep.subr.bf16.mxu0 %v2022
      %2218 = vmatpush1.bf16.msra.mxu0 %v2021
      %2219 = vmatprep.subr.bf16.mxu0 %v2017
      %2220 = vmatpush1.bf16.msra.mxu0 %v2016
      %2221 = vmatprep.subr.bf16.mxu0 %v2012
      %2222 = vmatpush1.bf16.msra.mxu0 %v2011
      %2223 = vmatprep.subr.bf16.mxu0 %v2007
      %2224 = vmatpush1.bf16.msra.mxu0 %v2006
      %2225 = vmatprep.subr.bf16.mxu0 %v2002
      %2226 = vmatpush1.bf16.msra.mxu0 %v2001
      %2227 = vmatprep.subr.bf16.mxu0 %v1997
      %2228 = vmatpush1.bf16.msra.mxu0 %v1996
      %2229 = vmatprep.subr.bf16.mxu0 0
      %2230 = vmatpush2.bf16.msra.mxu0 0
      %2231 = vmatprep.subr.bf16.mxu0 0
      %2232 = vmatpush2.bf16.msra.mxu0 0
      %2233 = vmatprep.subr.bf16.mxu0 0
      %2234 = vmatpush2.bf16.msra.mxu0 0
      %2235 = vmatprep.subr.bf16.mxu0 0
      %2236 = vmatpush2.bf16.msra.mxu0 0
      %2237 = vmatprep.subr.bf16.mxu0 0
      %2238 = vmatpush2.bf16.msra.mxu0 0
      %2239 = vmatprep.subr.bf16.mxu0 0
      %2240 = vmatpush2.bf16.msra.mxu0 0
      %2241 = vmatprep.subr.bf16.mxu0 0
      %2242 = vmatpush2.bf16.msra.mxu0 0
      %2243 = vmatprep.subr.bf16.mxu0 0
      %2244 = vmatpush2.bf16.msra.mxu0 0
      %2245 = vmatprep.mubr.bf16.mxu0 0
      %2246 = vmatmul.mubr.bf16.gmra.mxu0 %v1867
      %v2247 = vpop.f32.mrf.mxu0
      %v2248 = vadd.f32 0.0, %v2247
      %v2249 = vpop.f32.mrf.mxu0
      %v2250 = vadd.f32 0.0, %v2249
      %v2251 = vpop.f32.mrf.mxu0
      %v2252 = vadd.f32 0.0, %v2251
      %v2253 = vpop.f32.mrf.mxu0
      %v2254 = vadd.f32 0.0, %v2253
      %2255 = vdwg.mxu0
      %2256 = vmatprep.subr.bf16.mxu0 %v2034
      %2257 = vmatpush1.bf16.msra.mxu0 %v2033
      %2258 = vmatprep.subr.bf16.mxu0 %v2029
      %2259 = vmatpush1.bf16.msra.mxu0 %v2028
      %2260 = vmatprep.subr.bf16.mxu0 %v2024
      %2261 = vmatpush1.bf16.msra.mxu0 %v2023
      %2262 = vmatprep.subr.bf16.mxu0 %v2019
      %2263 = vmatpush1.bf16.msra.mxu0 %v2018
      %2264 = vmatprep.subr.bf16.mxu0 %v2014
      %2265 = vmatpush1.bf16.msra.mxu0 %v2013
      %2266 = vmatprep.subr.bf16.mxu0 %v2009
      %2267 = vmatpush1.bf16.msra.mxu0 %v2008
      %2268 = vmatprep.subr.bf16.mxu0 %v2004
      %2269 = vmatpush1.bf16.msra.mxu0 %v2003
      %2270 = vmatprep.subr.bf16.mxu0 %v1999
      %2271 = vmatpush1.bf16.msra.mxu0 %v1998
      %2272 = vmatprep.subr.bf16.mxu0 0
      %2273 = vmatpush2.bf16.msra.mxu0 0
      %2274 = vmatprep.subr.bf16.mxu0 0
      %2275 = vmatpush2.bf16.msra.mxu0 0
      %2276 = vmatprep.subr.bf16.mxu0 0
      %2277 = vmatpush2.bf16.msra.mxu0 0
      %2278 = vmatprep.subr.bf16.mxu0 0
      %2279 = vmatpush2.bf16.msra.mxu0 0
      %2280 = vmatprep.subr.bf16.mxu0 0
      %2281 = vmatpush2.bf16.msra.mxu0 0
      %2282 = vmatprep.subr.bf16.mxu0 0
      %2283 = vmatpush2.bf16.msra.mxu0 0
      %2284 = vmatprep.subr.bf16.mxu0 0
      %2285 = vmatpush2.bf16.msra.mxu0 0
      %2286 = vmatprep.subr.bf16.mxu0 0
      %2287 = vmatpush2.bf16.msra.mxu0 0
      %2288 = vmatprep.mubr.bf16.mxu0 0
      %2289 = vmatmul.mubr.bf16.gmra.mxu0 %v1867
      %v2290 = vpop.f32.mrf.mxu0
      %v2291 = vadd.f32 0.0, %v2290
      %v2292 = vpop.f32.mrf.mxu0
      %v2293 = vadd.f32 0.0, %v2292
      %v2294 = vpop.f32.mrf.mxu0
      %v2295 = vadd.f32 0.0, %v2294
      %v2296 = vpop.f32.mrf.mxu0
      %v2297 = vadd.f32 0.0, %v2296
      %2298 = vdwg.mxu0
      %2299 = vmatprep.subr.bf16.mxu0 0
      %2300 = vmatpush1.bf16.msra.mxu0 %v2035
      %2301 = vmatprep.subr.bf16.mxu0 0
      %2302 = vmatpush1.bf16.msra.mxu0 %v2030
      %2303 = vmatprep.subr.bf16.mxu0 0
      %2304 = vmatpush1.bf16.msra.mxu0 %v2025
      %2305 = vmatprep.subr.bf16.mxu0 0
      %2306 = vmatpush1.bf16.msra.mxu0 %v2020
      %2307 = vmatprep.subr.bf16.mxu0 0
      %2308 = vmatpush1.bf16.msra.mxu0 %v2015
      %2309 = vmatprep.subr.bf16.mxu0 0
      %2310 = vmatpush1.bf16.msra.mxu0 %v2010
      %2311 = vmatprep.subr.bf16.mxu0 0
      %2312 = vmatpush1.bf16.msra.mxu0 %v2005
      %2313 = vmatprep.subr.bf16.mxu0 0
      %2314 = vmatpush1.bf16.msra.mxu0 %v2000
      %2315 = vmatprep.subr.bf16.mxu0 0
      %2316 = vmatpush2.bf16.msra.mxu0 0
      %2317 = vmatprep.subr.bf16.mxu0 0
      %2318 = vmatpush2.bf16.msra.mxu0 0
      %2319 = vmatprep.subr.bf16.mxu0 0
      %2320 = vmatpush2.bf16.msra.mxu0 0
      %2321 = vmatprep.subr.bf16.mxu0 0
      %2322 = vmatpush2.bf16.msra.mxu0 0
      %2323 = vmatprep.subr.bf16.mxu0 0
      %2324 = vmatpush2.bf16.msra.mxu0 0
      %2325 = vmatprep.subr.bf16.mxu0 0
      %2326 = vmatpush2.bf16.msra.mxu0 0
      %2327 = vmatprep.subr.bf16.mxu0 0
      %2328 = vmatpush2.bf16.msra.mxu0 0
      %2329 = vmatprep.subr.bf16.mxu0 0
      %2330 = vmatpush2.bf16.msra.mxu0 0
      %2331 = vmatprep.mubr.bf16.mxu0 0
      %2332 = vmatmul.mubr.bf16.gmra.mxu0 %v1867
      %v2333 = vpop.f32.mrf.mxu0
      %v2334 = vadd.f32 0.0, %v2333
      %v2335 = vpop.f32.mrf.mxu0
      %v2336 = vpop.f32.mrf.mxu0
      %v2337 = vadd.f32 0.0, %v2336
      %v2338 = vpop.f32.mrf.mxu0
      %2339 = vdwg.mxu0
      %v2340 = vadd.f32 %v1804, %v2248
      %v2341 = vadd.f32 %v1805, %v2250
      %v2342 = vadd.f32 %v1806, %v2291
      %v2343 = vadd.f32 %v1807, %v2293
      %v2344 = vadd.f32 %v1808, %v2334
      %v2345 = vadd.f32 %v1809, %v2252
      %v2346 = vadd.f32 %v1810, %v2254
      %v2347 = vadd.f32 %v1811, %v2295
      %v2348 = vadd.f32 %v1812, %v2297
      %v2349 = vadd.f32 %v1813, %v2337
      %v2350 = vmul.f32 %v2203, %v2203
      %v2351 = vmul.f32 %v2204, %v2204
      %v2352 = vmul.f32 %v2208, %v2208
      %v2353 = vmul.f32 %v2209, %v2209
      %v2354 = vmul.f32 %v2206, %v2206
      %v2355 = vmul.f32 %v2207, %v2207
      %v2356 = vmul.f32 %v2211, %v2211
      %v2357 = vmul.f32 %v2212, %v2212
      %v2358 = vadd.f32 %v2350, %v2354
      %v2359 = vadd.f32 %v2351, %v2355
      %v2360 = vadd.f32 %v2352, %v2356
      %v2361 = vadd.f32 %v2353, %v2357
      %v2362 = vrsqrt.pop %v2358
      %v2363 = vmul.f32 %v2358, %v2362
      %vm2364 = vcmp.eq.f32.partialorder %v2358, inf
      %v2365 = vsel %vm2364, %v2358, %v2363
      %vm2366 = vcmp.eq.f32.partialorder %v2358, 0.0
      %v2367 = vand.u32 %v2358, 2147483648
      %v2368 = vsel %vm2366, %v2367, %v2365
      %v2369 = vrsqrt.pop %v2359
      %v2370 = vmul.f32 %v2359, %v2369
      %vm2371 = vcmp.eq.f32.partialorder %v2359, inf
      %v2372 = vsel %vm2371, %v2359, %v2370
      %vm2373 = vcmp.eq.f32.partialorder %v2359, 0.0
      %v2374 = vand.u32 %v2359, 2147483648
      %v2375 = vsel %vm2373, %v2374, %v2372
      %v2376 = vrsqrt.pop %v2360
      %v2377 = vmul.f32 %v2360, %v2376
      %vm2378 = vcmp.eq.f32.partialorder %v2360, inf
      %v2379 = vsel %vm2378, %v2360, %v2377
      %vm2380 = vcmp.eq.f32.partialorder %v2360, 0.0
      %v2381 = vand.u32 %v2360, 2147483648
      %v2382 = vsel %vm2380, %v2381, %v2379
      %v2383 = vrsqrt.pop %v2361
      %v2384 = vmul.f32 %v2361, %v2383
      %vm2385 = vcmp.eq.f32.partialorder %v2361, inf
      %v2386 = vsel %vm2385, %v2361, %v2384
      %vm2387 = vcmp.eq.f32.partialorder %v2361, 0.0
      %v2388 = vand.u32 %v2361, 2147483648
      %v2389 = vsel %vm2387, %v2388, %v2386
      %v2390 = vand.u32 2147483647, %v2205
      %v2391 = vand.u32 2147483647, %v2210
      %v2392 = vmul.f32 %v2340, %v2340
      %v2393 = vmul.f32 %v2341, %v2341
      %v2394 = vmul.f32 %v2345, %v2345
      %v2395 = vmul.f32 %v2346, %v2346
      %v2396 = vmul.f32 %v2343, %v2343
      %v2397 = vmul.f32 %v2344, %v2344
      %v2398 = vmul.f32 %v2348, %v2348
      %v2399 = vmul.f32 %v2349, %v2349
      %v2400 = vadd.f32 %v2392, %v2396
      %v2401 = vadd.f32 %v2393, %v2397
      %v2402 = vadd.f32 %v2394, %v2398
      %v2403 = vadd.f32 %v2395, %v2399
      %v2404 = vrsqrt.pop %v2400
      %v2405 = vmul.f32 %v2400, %v2404
      %vm2406 = vcmp.eq.f32.partialorder %v2400, inf
      %v2407 = vsel %vm2406, %v2400, %v2405
      %vm2408 = vcmp.eq.f32.partialorder %v2400, 0.0
      %v2409 = vand.u32 %v2400, 2147483648
      %v2410 = vsel %vm2408, %v2409, %v2407
      %v2411 = vrsqrt.pop %v2401
      %v2412 = vmul.f32 %v2401, %v2411
      %vm2413 = vcmp.eq.f32.partialorder %v2401, inf
      %v2414 = vsel %vm2413, %v2401, %v2412
      %vm2415 = vcmp.eq.f32.partialorder %v2401, 0.0
      %v2416 = vand.u32 %v2401, 2147483648
      %v2417 = vsel %vm2415, %v2416, %v2414
      %v2418 = vrsqrt.pop %v2402
      %v2419 = vmul.f32 %v2402, %v2418
      %vm2420 = vcmp.eq.f32.partialorder %v2402, inf
      %v2421 = vsel %vm2420, %v2402, %v2419
      %vm2422 = vcmp.eq.f32.partialorder %v2402, 0.0
      %v2423 = vand.u32 %v2402, 2147483648
      %v2424 = vsel %vm2422, %v2423, %v2421
      %v2425 = vrsqrt.pop %v2403
      %v2426 = vmul.f32 %v2403, %v2425
      %vm2427 = vcmp.eq.f32.partialorder %v2403, inf
      %v2428 = vsel %vm2427, %v2403, %v2426
      %vm2429 = vcmp.eq.f32.partialorder %v2403, 0.0
      %v2430 = vand.u32 %v2403, 2147483648
      %v2431 = vsel %vm2429, %v2430, %v2428
      %v2432 = vand.u32 2147483647, %v2342
      %v2433 = vand.u32 2147483647, %v2347
      %v2434 = vlaneseq
      %v2435 = vshrl.u32 %v2434, 7
      %v2436 = vadd.s32 %v2435, 8
      %v2437 = vstv %s245
      %vm2438 = vcmp.lt.s32.totalorder %v2435, %v2437
      %vm2439 = vcmp.lt.s32.totalorder %v2436, %v2437
      %v2440 = vsub.f32 %v2368, %v2410
      %v2441 = vsub.f32 %v2375, %v2417
      %v2442 = vsub.f32 %v2382, %v2424
      %v2443 = vsub.f32 %v2389, %v2431
      %v2444 = vand.u32 2147483647, %v2440
      %v2445 = vand.u32 2147483647, %v2441
      %v2446 = vand.u32 2147483647, %v2442
      %v2447 = vand.u32 2147483647, %v2443
      %v2448 = vsel %vm2438, 1, 0
      %v2449 = vsel %vm2439, 1, 0
      %vm2450 = vcmp.eq.s32.totalorder %v2448, 1
      %vm2451 = vcmp.eq.s32.totalorder %v2449, 1
      %v2452 = vsel %vm2450, %v2444, 0.0
      %v2453 = vsel %vm2450, %v2445, 0.0
      %v2454 = vsel %vm2451, %v2446, 0.0
      %v2455 = vsel %vm2451, %v2447, 0.0
      %v2456 = vsub.f32 %v2390, %v2432
      %v2457 = vsub.f32 %v2391, %v2433
      %v2458 = vand.u32 2147483647, %v2456
      %v2459 = vand.u32 2147483647, %v2457
      %v2460 = vsel %vm2450, %v2458, 0.0
      %v2461 = vsel %vm2451, %v2459, 0.0
      %v2462 = vld [vmem:[%s230] sm:$0xff]
      %v2463 = vld [vmem:[%s230 + $0x8] sm:$0xff]
      %v2464 = vld [vmem:[%s230 + $0x10] sm:$0xff]
      %v2465 = vld [vmem:[%s230 + $0x18] sm:$0xff]
      %v2466 = vld [vmem:[%s230 + $0x20] sm:$0xff]
      %v2467 = vld [vmem:[%s230 + $0x28] sm:$0xff]
      %v2468 = vadd.f32 %v2462, %v2452
      %v2469 = vadd.f32 %v2463, %v2453
      %v2470 = vadd.f32 %v2464, %v2460
      %v2471 = vadd.f32 %v2465, %v2454
      %v2472 = vadd.f32 %v2466, %v2455
      %v2473 = vadd.f32 %v2467, %v2461
      %2474 = vst [vmem:[%s230] sm:$0xff] %v2468
      %2475 = vst [vmem:[%s230 + $0x8] sm:$0xff] %v2469
      %2476 = vst [vmem:[%s230 + $0x10] sm:$0xff] %v2470
      %2477 = vst [vmem:[%s230 + $0x18] sm:$0xff] %v2471
      %2478 = vst [vmem:[%s230 + $0x20] sm:$0xff] %v2472
      %2479 = vst [vmem:[%s230 + $0x28] sm:$0xff] %v2473
      %p2480 = scmp.lt.s32.totalorder %s18, 0
      %s2481 = scalar_select %p2480, %s18, 0
      %s2482 = smul.addr %s2481, 6
      %s2483 = smul.addr %s2482, 8
      %s2484 = scalar_lea.vmem %s3, %s2483
      // Predicated region
      $region37: #{aec_loss.3} parent=31 // pred_check
        %p2485 = pneg %p125
      $region38: #{aec_loss.3} parent=31 // pred_check_branch
        %2487 = sbr.rel (%p2485) target = $region40
      $region39: #{aec_loss.3} parent=31 // pred_region
        _
      $region40: #{aec_loss.3} parent=31 // pred_fallthru
        _
      // Predicated region
      $region41: #{aec_loss.3} parent=31 // pred_check
        %p2488 = pneg %p125
      $region42: #{aec_loss.3} parent=31 // pred_check_branch
        %2490 = sbr.rel (%p2488) target = $region44
      $region43: #{aec_loss.3} parent=31 // pred_region
        %p2491 = scmp.lt.s32.totalorder %s18, 0
        %s2492 = scalar_select %p2491, %s18, 0
        %s2493 = smul.addr %s2492, 6
        %s2494 = smul.addr %s2493, 8
        %s2495 = scalar_lea.vmem %s3, %s2494
      $region44: #{aec_loss.3} parent=31 // pred_fallthru
        _
    $region32: #{aec_loss.3} parent=5 // pred_fallthru
      _
    %p2496 = scmp.le.s32.totalorder 2, %s9
    // Predicated region
    $region45: #{aec_loss.3} parent=5 // pred_check
      %p2497 = pneg %p2496
    $region46: #{aec_loss.3} parent=5 // pred_check_branch
      %2499 = sbr.rel (%p2497) target = $region48
    $region47: #{aec_loss.3} parent=5 // pred_region
      %s2500 = ssub.s32 %s9, 2
    $region48: #{aec_loss.3} parent=5 // pred_fallthru
      _
  $region6: #{aec_loss.3} parent=0 // loop_footer
    %s13 = sadd.s32 1, %s9
  $region7: #{aec_loss.3} parent=0 // loop_footer_branch
    %8 = sbr.rel target = $region3
  $region8: #{aec_loss.3} parent=0 // loop_exit
    _

</llo_original>
